<compile_context>
chip_gen: v5e
topology: v5e:2x2
jax: 0.10.0
libtpu: 0.0.40
codegen_flags: <defaults>
</compile_context>

<pallas_src>
import math

import jax
import jax.numpy as jnp
from jax.experimental import pallas as pl
from jax.experimental.pallas import tpu as pltpu


# ----------------------- generation-aware configuration ----------------------

_CFG = None


def _tpu_config():
    """VMEM budget / tile caps tuned per TPU generation (v5e / v6e / v7x)."""
    global _CFG
    if _CFG is not None:
        return _CFG
    kind = ""
    try:
        kind = jax.devices()[0].device_kind.lower()
    except Exception:
        pass
    is_v7 = "v7" in kind
    vmem_cap = None
    try:
        vmem_cap = int(getattr(pltpu.get_tpu_info(), "vmem_capacity_bytes"))
    except Exception:
        vmem_cap = None
    if vmem_cap is None:
        vmem_cap = (64 if is_v7 else 128) * 1024 * 1024
    # Leave headroom below physical capacity (v7x ~44 MiB, v5e/v6e ~90 MiB).
    vmem_limit = min((int(vmem_cap * 0.70) >> 20) << 20, 96 * 1024 * 1024)
    _CFG = dict(
        vmem_limit=vmem_limit,
        # v5e/v6e: larger query tiles amortise the repeated K/V DMA and fill
        # the MXU M-dimension; v7x: smaller cap + force >=2 tiles so both
        # TensorCores get work on the "parallel" axis.
        max_q_tile=128 if is_v7 else 256,
        max_row_tile=512 if is_v7 else 1024,
        split_for_two_cores=is_v7,
    )
    return _CFG


# ----------------------------- helpers --------------------------------------

def _pick_tile(n, max_tile, align=16):
    """Largest tile <= max_tile that divides n and is `align`-aligned, else n."""
    if n <= max_tile:
        return n
    t = (max_tile // align) * align
    while t >= align:
        if n % t == 0:
            return t
        t -= align
    return n


def _erf_f32(x):
    # TODO(synk): lax.erf lowering availability in Mosaic varies; use a
    # float32-accurate erf polynomial (A&S 7.1.26, |err|<1.6e-7) built only
    # from exp/mul/where so it always lowers.
    a1, a2, a3, a4, a5 = (0.254829592, -0.284496736, 1.421413741,
                          -1.453152027, 1.061405429)
    p = 0.3275911
    ax = jnp.abs(x)
    t = 1.0 / (1.0 + p * ax)
    poly = ((((a5 * t + a4) * t + a3) * t + a2) * t + a1) * t
    y = 1.0 - poly * jnp.exp(-ax * ax)
    return jnp.where(x >= 0.0, y, -y)


def _gelu_exact(x):
    # F.gelu default (erf-based, non-approximate); FF kernel is HBM-bound so
    # the f32 polynomial is effectively free.
    return 0.5 * x * (1.0 + _erf_f32(x * (1.0 / math.sqrt(2.0))))


# ------------------------- attention kernel ---------------------------------

def _make_attn_kernel(head_num, head_dim):
    H = head_num
    inv_h = 1.0 / float(H)
    scale = 1.0 / math.sqrt(float(head_dim))

    def kernel(q_ref, sig_ref, k_ref, v_ref, z_ref, p_ref, s_ref):
        qt = pl.program_id(0)                       # outer, "parallel"
        h = pl.program_id(1)                        # inner head reduction

        _, B, N, hd = k_ref.shape
        TQ = q_ref.shape[2]

        @pl.when(h == 0)
        def _():
            p_ref[...] = jnp.zeros_like(p_ref)
            s_ref[...] = jnp.zeros_like(s_ref)

        # ---- prior association ----------------------------------------------
        # |i-j| generated in-kernel from iota (no N^2 HBM array / DMA).  The
        # broadcast divide by sigma is reduced to a per-row (B,TQ,1)
        # reciprocal; the 1/(sqrt(2*pi)*sigma) factor cancels exactly in the
        # row normalisation and is dropped; 1/head_num is folded into the
        # per-row normaliser (no extra full-block multiply).
        sig = sig_ref[0]                                       # (B, TQ, 1) raw
        neg_half_inv_sig2 = -0.5 / (sig * sig)                 # (B, TQ, 1)
        row = jax.lax.broadcasted_iota(jnp.int32, (TQ, N), 0) + qt * TQ
        col = jax.lax.broadcasted_iota(jnp.int32, (TQ, N), 1)
        d = (row - col).astype(jnp.float32)
        dist_sq = d * d                                        # (TQ, N)
        gauss = jnp.exp(dist_sq[None, :, :] * neg_half_inv_sig2)   # (B,TQ,N)
        p_ref[...] += gauss * (inv_h / jnp.sum(gauss, axis=-1, keepdims=True))

        # ---- series association ----------------------------------------------
        # NOTE: softmax over dim=0 (the BATCH axis), reproducing the reference
        # implementation's F.softmax(..., dim=0).  scale folded into the small
        # (B,TQ,hd) q tile, not the (B,TQ,N) scores.
        qs = (q_ref[0] * scale).astype(jnp.bfloat16)
        scores = jnp.einsum('btd,bmd->btm', qs, k_ref[0],
                            preferred_element_type=jnp.float32)   # (B,TQ,N)
        m = jnp.max(scores, axis=0, keepdims=True)
        e = jnp.exp(scores - m)
        # inv_h folded into the (1,TQ,N) normaliser -> sS == series / head_num.
        sS = e * (inv_h / jnp.sum(e, axis=0, keepdims=True))
        s_ref[...] += sS

        # ---- reconstruction Z = S @ V (undo the inv_h fold on the small z) ---
        z = jnp.einsum('btm,bmd->btd', sS.astype(jnp.bfloat16), v_ref[0],
                       preferred_element_type=jnp.float32)
        z_ref[0] = (z * float(H)).astype(z_ref.dtype)

    return kernel


def multi_head_attention(x, wq, wk, wv, ws, head_num):
    cfg = _tpu_config()
    B, N, D = x.shape
    H = head_num
    hd = D // H

    # Per-head layout (H, B, N, hd); trailing-dim split matches torch.split.
    xh = jnp.transpose(x.reshape(B, N, H, hd), (2, 0, 1, 3))

    # Q/K/V/sigma projections hoisted out of the (qt, h) grid: one fused f32
    # einsum per layer (tiny vs. the O(N^2) work) instead of per query tile.
    w_all = jnp.concatenate([wq, wk, wv, ws], axis=-1)           # (H, hd, 3*hd+1)
    proj = jnp.einsum('hbnd,hde->hbne', xh, w_all,
                      precision=jax.lax.Precision.HIGHEST)
    q = proj[..., 0 * hd:1 * hd]                                  # (H,B,N,hd) f32
    k = proj[..., 1 * hd:2 * hd].astype(jnp.bfloat16)             # bf16: halves the
    v = proj[..., 2 * hd:3 * hd].astype(jnp.bfloat16)             # repeated K/V DMA
    sigma = proj[..., 3 * hd:]                                    # (H,B,N,1) raw

    max_q = cfg["max_q_tile"]
    if cfg["split_for_two_cores"] and N >= 32:
        max_q = min(max_q, max(16, (N // 2) // 16 * 16))          # n_qt >= 2 on v7x
    TQ = _pick_tile(N, max_q)
    n_qt = N // TQ

    kernel = _make_attn_kernel(H, hd)
    z, P, S = pl.pallas_call(
        kernel,
        out_shape=(jax.ShapeDtypeStruct((H, B, N, hd), jnp.bfloat16),
                   jax.ShapeDtypeStruct((B, N, N), jnp.float32),
                   jax.ShapeDtypeStruct((B, N, N), jnp.float32)),
        grid_spec=pltpu.PrefetchScalarGridSpec(
            num_scalar_prefetch=0,
            grid=(n_qt, H),      # (parallel query tiles, head reduction)
            in_specs=[
                pl.BlockSpec((1, B, TQ, hd), lambda qt, h: (h, 0, qt, 0)),  # Q tile
                pl.BlockSpec((1, B, TQ, 1), lambda qt, h: (h, 0, qt, 0)),   # sigma tile
                pl.BlockSpec((1, B, N, hd), lambda qt, h: (h, 0, 0, 0)),    # K (bf16)
                pl.BlockSpec((1, B, N, hd), lambda qt, h: (h, 0, 0, 0)),    # V (bf16)
            ],
            out_specs=[
                pl.BlockSpec((1, B, TQ, hd), lambda qt, h: (h, 0, qt, 0)),  # Z head-major
                pl.BlockSpec((B, TQ, N), lambda qt, h: (0, qt, 0)),         # P accumulator
                pl.BlockSpec((B, TQ, N), lambda qt, h: (0, qt, 0)),         # S accumulator
            ]),
        compiler_params=pltpu.CompilerParams(
            dimension_semantics=("parallel", "arbitrary"),
            vmem_limit_bytes=cfg["vmem_limit"]),
    )(q, sigma, k, v)

    # z stays head-major bf16; the FF kernel does the head concat (no transpose).
    return z, P, S


# ------------------ feed-forward + LayerNorm kernel --------------------------

def _ff_kernel(x_ref, z_ref, w1_ref, b1_ref, w2_ref, b2_ref,
               g1_ref, be1_ref, g2_ref, be2_ref, out_ref):
    eps = 1e-5

    def layer_norm(y, g, b):
        mu = jnp.mean(y, axis=-1, keepdims=True)
        var = jnp.mean(jnp.square(y - mu), axis=-1, keepdims=True)
        return (y - mu) * jax.lax.rsqrt(var + eps) * g + b

    x = x_ref[...]                                    # (TR, D) f32
    H = z_ref.shape[0]
    # torch.cat of per-head reconstructions on the feature axis, done in-kernel
    # from the head-major bf16 z (static hd-wide slices).
    nx = jnp.concatenate([z_ref[h] for h in range(H)],
                         axis=-1).astype(jnp.float32)             # (TR, D)

    xb = layer_norm(x + nx, g1_ref[0], be1_ref[0])                # norm1 (dropout p=0)
    hid = jnp.dot(xb.astype(jnp.bfloat16), w1_ref[...],
                  preferred_element_type=jnp.float32) + b1_ref[0]
    hid = _gelu_exact(hid)
    y = jnp.dot(hid.astype(jnp.bfloat16), w2_ref[...],
                preferred_element_type=jnp.float32) + b2_ref[0]
    out_ref[...] = layer_norm(xb + y, g2_ref[0], be2_ref[0])      # norm2


def ff_block(x, z_heads, w1, b1, w2, b2, g1, be1, g2, be2):
    cfg = _tpu_config()
    B, N, D = x.shape
    H, _, _, hd = z_heads.shape
    dff = w1.shape[-1]
    R = B * N

    xf = x.reshape(R, D)                    # free reshape
    zf = z_heads.reshape(H, R, hd)          # free reshape (B, N adjacent)

    max_r = cfg["max_row_tile"]
    if cfg["split_for_two_cores"] and R >= 32:
        max_r = min(max_r, max(16, (R // 2) // 16 * 16))          # n_rt >= 2 on v7x
    TR = _pick_tile(R, max_r)
    n_rt = R // TR

    w1b = w1.astype(jnp.bfloat16)
    w2b = w2.astype(jnp.bfloat16)

    # TODO(synk): mark the constant-index weight/bias/LN BlockSpecs with
    # pipeline_mode=pl.Buffered(1) once single-buffered inputs are verified on
    # the deployed JAX version (saves one resident copy of w1/w2 in VMEM).
    out = pl.pallas_call(
        _ff_kernel,
        out_shape=jax.ShapeDtypeStruct((R, D), jnp.float32),
        grid_spec=pltpu.PrefetchScalarGridSpec(
            num_scalar_prefetch=0,
            grid=(n_rt,),
            in_specs=[
                pl.BlockSpec((TR, D), lambda r: (r, 0)),
                pl.BlockSpec((H, TR, hd), lambda r: (0, r, 0)),
                pl.BlockSpec((D, dff), lambda r: (0, 0)),   # resident weights
                pl.BlockSpec((1, dff), lambda r: (0, 0)),
                pl.BlockSpec((dff, D), lambda r: (0, 0)),
                pl.BlockSpec((1, D), lambda r: (0, 0)),
                pl.BlockSpec((1, D), lambda r: (0, 0)),
                pl.BlockSpec((1, D), lambda r: (0, 0)),
                pl.BlockSpec((1, D), lambda r: (0, 0)),
                pl.BlockSpec((1, D), lambda r: (0, 0)),
            ],
            out_specs=pl.BlockSpec((TR, D), lambda r: (r, 0))),
        compiler_params=pltpu.CompilerParams(
            dimension_semantics=("parallel",),
            vmem_limit_bytes=cfg["vmem_limit"]),
    )(xf, zf, w1b, b1, w2b, b2, g1, be1, g2, be2)
    return out.reshape(B, N, D)


# --------------------------- model wrapper -----------------------------------

def init_params(key, layers, d_model, head_num, d_ff):
    hd = d_model // head_num
    params = []
    for _ in range(layers):
        key, *ks = jax.random.split(key, 8)
        params.append(dict(
            wq=jax.random.normal(ks[0], (head_num, hd, hd), jnp.float32) / math.sqrt(hd),
            wk=jax.random.normal(ks[1], (head_num, hd, hd), jnp.float32) / math.sqrt(hd),
            wv=jax.random.normal(ks[2], (head_num, hd, hd), jnp.float32) / math.sqrt(hd),
            ws=jax.random.normal(ks[3], (head_num, hd, 1), jnp.float32) / math.sqrt(hd),
            w1=jax.random.normal(ks[4], (d_model, d_ff), jnp.float32) / math.sqrt(d_model),
            b1=jax.random.normal(ks[5], (1, d_ff), jnp.float32) * 0.01,
            w2=jax.random.normal(ks[6], (d_ff, d_model), jnp.float32) / math.sqrt(d_ff),
            b2=jnp.zeros((1, d_model), jnp.float32),
            g1=jnp.ones((1, d_model), jnp.float32),
            be1=jnp.zeros((1, d_model), jnp.float32),
            g2=jnp.ones((1, d_model), jnp.float32),
            be2=jnp.zeros((1, d_model), jnp.float32),
        ))
    return params


def anomaly_transformer(x, params, head_num):
    prior_list, series_list = [], []
    for p in params:
        z, P, S = multi_head_attention(x, p['wq'], p['wk'], p['wv'], p['ws'],
                                       head_num)
        x = ff_block(x, z, p['w1'], p['b1'], p['w2'], p['b2'],
                     p['g1'], p['be1'], p['g2'], p['be2'])
        prior_list.append(P)
        series_list.append(S)
    return x, prior_list, series_list


if __name__ == "__main__":
    B, N, d_model, head_num, layers = 2, 8, 32, 4, 2
    d_ff = 4 * d_model

    key = jax.random.PRNGKey(0)
    kx, kp = jax.random.split(key)
    x = jax.random.normal(kx, (B, N, d_model), jnp.float32)
    params = init_params(kp, layers, d_model, head_num, d_ff)

    fwd = jax.jit(lambda x, params: anomaly_transformer(x, params, head_num))
    out, prior_list, series_list = fwd(x, params)
    jax.block_until_ready((out, prior_list, series_list))

    assert out.shape == (B, N, d_model)
    assert len(prior_list) == layers and len(series_list) == layers
    assert all(p.shape == (B, N, N) for p in prior_list)
    assert all(s.shape == (B, N, N) for s in series_list)
    assert bool(jnp.all(jnp.isfinite(out)))
    assert all(bool(jnp.all(jnp.isfinite(p))) for p in prior_list)
    assert all(bool(jnp.all(jnp.isfinite(s))) for s in series_list)
    print("KERNEL_OK")
</pallas_src>

<mosaic_0001>
module attributes {stable_mosaic.version = 11 : i64} {
  func.func @kernel(%arg0: i32, %arg1: i32, %arg2: memref<1x2x8x8xf32, #tpu.memory_space<vmem>>, %arg3: memref<1x2x8x1xf32, #tpu.memory_space<vmem>>, %arg4: memref<1x2x8x8xbf16, #tpu.memory_space<vmem>>, %arg5: memref<1x2x8x8xbf16, #tpu.memory_space<vmem>>, %arg6: memref<1x2x8x8xbf16, #tpu.memory_space<vmem>>, %arg7: memref<2x8x8xf32, #tpu.memory_space<vmem>>, %arg8: memref<2x8x8xf32, #tpu.memory_space<vmem>>) attributes {dimension_semantics = [#tpu.dimension_semantics<parallel>, #tpu.dimension_semantics<arbitrary>], iteration_bounds = array<i64: 1, 4>, scalar_prefetch = 0 : i64, scratch_operands = 0 : i64, tpu.core_type = #tpu.core_type<tc>, window_params = [{transform_indices = @transform_0, window_bounds = array<i64: 1, 2, 8, 8>}, {transform_indices = @transform_1, window_bounds = array<i64: 1, 2, 8, 1>}, {transform_indices = @transform_2, window_bounds = array<i64: 1, 2, 8, 8>}, {transform_indices = @transform_3, window_bounds = array<i64: 1, 2, 8, 8>}, {transform_indices = @transform_4, window_bounds = array<i64: 1, 2, 8, 8>}, {transform_indices = @transform_5, window_bounds = array<i64: 2, 8, 8>}, {transform_indices = @transform_6, window_bounds = array<i64: 2, 8, 8>}]} {
    %c0_i32 = arith.constant 0 : i32
    %0 = arith.cmpi eq, %arg1, %c0_i32 : i32
    %1 = arith.extui %0 : i1 to i32
    %c0_i32_0 = arith.constant 0 : i32
    %2 = arith.cmpi ne, %1, %c0_i32_0 : i32
    scf.if %2 {
      %cst_41 = arith.constant 0.000000e+00 : f32
      %62 = vector.broadcast %cst_41 : f32 to vector<2x8x8xf32>
      %c0_42 = arith.constant 0 : index
      %c0_43 = arith.constant 0 : index
      %c0_44 = arith.constant 0 : index
      %63 = vector.load %arg7[%c0_42, %c0_43, %c0_44] : memref<2x8x8xf32, #tpu.memory_space<vmem>>, vector<2x8x8xf32>
      tpu.vector_store %arg7[%c0_42, %c0_43, %c0_44], %62 {strides = array<i32>} : memref<2x8x8xf32, #tpu.memory_space<vmem>>, vector<2x8x8xf32>,
      %cst_45 = arith.constant 0.000000e+00 : f32
      %64 = vector.broadcast %cst_45 : f32 to vector<2x8x8xf32>
      %c0_46 = arith.constant 0 : index
      %c0_47 = arith.constant 0 : index
      %c0_48 = arith.constant 0 : index
      %65 = vector.load %arg8[%c0_46, %c0_47, %c0_48] : memref<2x8x8xf32, #tpu.memory_space<vmem>>, vector<2x8x8xf32>
      tpu.vector_store %arg8[%c0_46, %c0_47, %c0_48], %64 {strides = array<i32>} : memref<2x8x8xf32, #tpu.memory_space<vmem>>, vector<2x8x8xf32>,
    } else {
    }
    %c0 = arith.constant 0 : index
    %c0_1 = arith.constant 0 : index
    %c0_2 = arith.constant 0 : index
    %c0_3 = arith.constant 0 : index
    %3 = vector.load %arg3[%c0, %c0_1, %c0_2, %c0_3] : memref<1x2x8x1xf32, #tpu.memory_space<vmem>>, vector<1x2x8x1xf32>
    %4 = vector.shape_cast %3 : vector<1x2x8x1xf32> to vector<2x8x1xf32>
    %5 = arith.mulf %4, %4 : vector<2x8x1xf32>
    %cst = arith.constant -5.000000e-01 : f32
    %6 = vector.broadcast %cst : f32 to vector<2x8x1xf32>
    %7 = arith.divf %6, %5 : vector<2x8x1xf32>
    %8 = tpu.iota {dimensions = array<i32: 0>} : vector<8x8xi32>
    %c8_i32 = arith.constant 8 : i32
    %9 = arith.muli %arg0, %c8_i32 : i32
    %10 = vector.broadcast %9 : i32 to vector<8x8xi32>
    %11 = arith.addi %8, %10 : vector<8x8xi32>
    %12 = tpu.iota {dimensions = array<i32: 1>} : vector<8x8xi32>
    %13 = arith.subi %11, %12 : vector<8x8xi32>
    %14 = arith.sitofp %13 : vector<8x8xi32> to vector<8x8xf32>
    %15 = arith.mulf %14, %14 : vector<8x8xf32>
    %16 = vector.shape_cast %15 : vector<8x8xf32> to vector<1x8x8xf32>
    %17 = vector.broadcast %16 : vector<1x8x8xf32> to vector<2x8x8xf32>
    %18 = vector.broadcast %7 : vector<2x8x1xf32> to vector<2x8x8xf32>
    %19 = arith.mulf %17, %18 : vector<2x8x8xf32>
    %20 = math.exp %19 : vector<2x8x8xf32>
    %c0_4 = arith.constant 0 : index
    %c0_5 = arith.constant 0 : index
    %c0_6 = arith.constant 0 : index
    %21 = vector.load %arg7[%c0_4, %c0_5, %c0_6] : memref<2x8x8xf32, #tpu.memory_space<vmem>>, vector<2x8x8xf32>
    %cst_7 = arith.constant dense<0.000000e+00> : vector<2x8xf32>
    %22 = vector.multi_reduction <add>, %20, %cst_7 [2] : vector<2x8x8xf32> to vector<2x8xf32>
    %23 = vector.shape_cast %22 : vector<2x8xf32> to vector<2x8x1xf32>
    %cst_8 = arith.constant 2.500000e-01 : f32
    %24 = vector.broadcast %cst_8 : f32 to vector<2x8x1xf32>
    %25 = arith.divf %24, %23 : vector<2x8x1xf32>
    %26 = vector.broadcast %25 : vector<2x8x1xf32> to vector<2x8x8xf32>
    %27 = arith.mulf %20, %26 : vector<2x8x8xf32>
    %28 = arith.addf %21, %27 : vector<2x8x8xf32>
    %c0_9 = arith.constant 0 : index
    %c0_10 = arith.constant 0 : index
    %c0_11 = arith.constant 0 : index
    %29 = vector.load %arg7[%c0_9, %c0_10, %c0_11] : memref<2x8x8xf32, #tpu.memory_space<vmem>>, vector<2x8x8xf32>
    tpu.vector_store %arg7[%c0_9, %c0_10, %c0_11], %28 {strides = array<i32>} : memref<2x8x8xf32, #tpu.memory_space<vmem>>, vector<2x8x8xf32>,
    %c0_12 = arith.constant 0 : index
    %c0_13 = arith.constant 0 : index
    %c0_14 = arith.constant 0 : index
    %c0_15 = arith.constant 0 : index
    %30 = vector.load %arg2[%c0_12, %c0_13, %c0_14, %c0_15] : memref<1x2x8x8xf32, #tpu.memory_space<vmem>>, vector<1x2x8x8xf32>
    %31 = vector.shape_cast %30 : vector<1x2x8x8xf32> to vector<2x8x8xf32>
    %cst_16 = arith.constant 0.353553385 : f32
    %32 = vector.broadcast %cst_16 : f32 to vector<2x8x8xf32>
    %33 = arith.mulf %31, %32 : vector<2x8x8xf32>
    %34 = arith.truncf %33 : vector<2x8x8xf32> to vector<2x8x8xbf16>
    %c0_17 = arith.constant 0 : index
    %c0_18 = arith.constant 0 : index
    %c0_19 = arith.constant 0 : index
    %c0_20 = arith.constant 0 : index
    %35 = vector.load %arg4[%c0_17, %c0_18, %c0_19, %c0_20] : memref<1x2x8x8xbf16, #tpu.memory_space<vmem>>, vector<1x2x8x8xbf16>
    %36 = vector.shape_cast %35 : vector<1x2x8x8xbf16> to vector<2x8x8xbf16>
    "tpu.trace_start"() <{level = 10 : i32, message = "btd,bmd->btm"}> : () -> ()
    %cst_21 = arith.constant dense<0.000000e+00> : vector<2x8x8xf32>
    %37 = tpu.matmul %34, %36, %cst_21 {dimension_numbers = #tpu.dot_dimension_numbers<[2], [2], [1], [1], [0, 0, 0, 1, 1, 1], [0], [0]>} : vector<2x8x8xbf16>, vector<2x8x8xbf16>, vector<2x8x8xf32> -> vector<2x8x8xf32>
    "tpu.trace_stop"() : () -> ()
    %cst_22 = arith.constant dense<0xFF800000> : vector<8x8xf32>
    %38 = vector.multi_reduction <maximumf>, %37, %cst_22 [0] : vector<2x8x8xf32> to vector<8x8xf32>
    %39 = vector.shape_cast %38 : vector<8x8xf32> to vector<1x8x8xf32>
    %40 = vector.broadcast %39 : vector<1x8x8xf32> to vector<2x8x8xf32>
    %41 = arith.subf %37, %40 : vector<2x8x8xf32>
    %42 = math.exp %41 : vector<2x8x8xf32>
    %cst_23 = arith.constant dense<0.000000e+00> : vector<8x8xf32>
    %43 = vector.multi_reduction <add>, %42, %cst_23 [0] : vector<2x8x8xf32> to vector<8x8xf32>
    %44 = vector.shape_cast %43 : vector<8x8xf32> to vector<1x8x8xf32>
    %cst_24 = arith.constant 2.500000e-01 : f32
    %45 = vector.broadcast %cst_24 : f32 to vector<1x8x8xf32>
    %46 = arith.divf %45, %44 : vector<1x8x8xf32>
    %47 = vector.broadcast %46 : vector<1x8x8xf32> to vector<2x8x8xf32>
    %48 = arith.mulf %42, %47 : vector<2x8x8xf32>
    %c0_25 = arith.constant 0 : index
    %c0_26 = arith.constant 0 : index
    %c0_27 = arith.constant 0 : index
    %49 = vector.load %arg8[%c0_25, %c0_26, %c0_27] : memref<2x8x8xf32, #tpu.memory_space<vmem>>, vector<2x8x8xf32>
    %50 = arith.addf %49, %48 : vector<2x8x8xf32>
    %c0_28 = arith.constant 0 : index
    %c0_29 = arith.constant 0 : index
    %c0_30 = arith.constant 0 : index
    %51 = vector.load %arg8[%c0_28, %c0_29, %c0_30] : memref<2x8x8xf32, #tpu.memory_space<vmem>>, vector<2x8x8xf32>
    tpu.vector_store %arg8[%c0_28, %c0_29, %c0_30], %50 {strides = array<i32>} : memref<2x8x8xf32, #tpu.memory_space<vmem>>, vector<2x8x8xf32>,
    %52 = arith.truncf %48 : vector<2x8x8xf32> to vector<2x8x8xbf16>
    %c0_31 = arith.constant 0 : index
    %c0_32 = arith.constant 0 : index
    %c0_33 = arith.constant 0 : index
    %c0_34 = arith.constant 0 : index
    %53 = vector.load %arg5[%c0_31, %c0_32, %c0_33, %c0_34] : memref<1x2x8x8xbf16, #tpu.memory_space<vmem>>, vector<1x2x8x8xbf16>
    %54 = vector.shape_cast %53 : vector<1x2x8x8xbf16> to vector<2x8x8xbf16>
    "tpu.trace_start"() <{level = 10 : i32, message = "btm,bmd->btd"}> : () -> ()
    %cst_35 = arith.constant dense<0.000000e+00> : vector<2x8x8xf32>
    %55 = tpu.matmul %52, %54, %cst_35 {dimension_numbers = #tpu.dot_dimension_numbers<[2], [1], [1], [2], [0, 0, 0, 1, 1, 2], [0], [0]>} : vector<2x8x8xbf16>, vector<2x8x8xbf16>, vector<2x8x8xf32> -> vector<2x8x8xf32>
    "tpu.trace_stop"() : () -> ()
    %cst_36 = arith.constant 4.000000e+00 : f32
    %56 = vector.broadcast %cst_36 : f32 to vector<2x8x8xf32>
    %57 = arith.mulf %55, %56 : vector<2x8x8xf32>
    %58 = arith.truncf %57 : vector<2x8x8xf32> to vector<2x8x8xbf16>
    %c0_37 = arith.constant 0 : index
    %c0_38 = arith.constant 0 : index
    %c0_39 = arith.constant 0 : index
    %c0_40 = arith.constant 0 : index
    %59 = vector.load %arg6[%c0_37, %c0_38, %c0_39, %c0_40] : memref<1x2x8x8xbf16, #tpu.memory_space<vmem>>, vector<1x2x8x8xbf16>
    %60 = vector.shape_cast %59 : vector<1x2x8x8xbf16> to vector<2x8x8xbf16>
    %61 = vector.shape_cast %58 : vector<2x8x8xbf16> to vector<1x2x8x8xbf16>
    tpu.vector_store %arg6[%c0_37, %c0_38, %c0_39, %c0_40], %61 {strides = array<i32>} : memref<1x2x8x8xbf16, #tpu.memory_space<vmem>>, vector<1x2x8x8xbf16>,
    return
  }
  func.func @transform_0(%arg0: i32, %arg1: i32) -> (i32, i32, i32, i32) {
    %c0_i32 = arith.constant 0 : i32
    %c0_i32_0 = arith.constant 0 : i32
    %c0_i32_1 = arith.constant 0 : i32
    return %arg1, %c0_i32, %arg0, %c0_i32_0 : i32, i32, i32, i32
  }
  func.func @transform_1(%arg0: i32, %arg1: i32) -> (i32, i32, i32, i32) {
    %c0_i32 = arith.constant 0 : i32
    %c0_i32_0 = arith.constant 0 : i32
    %c0_i32_1 = arith.constant 0 : i32
    return %arg1, %c0_i32, %arg0, %c0_i32_0 : i32, i32, i32, i32
  }
  func.func @transform_2(%arg0: i32, %arg1: i32) -> (i32, i32, i32, i32) {
    %c0_i32 = arith.constant 0 : i32
    %c0_i32_0 = arith.constant 0 : i32
    %c0_i32_1 = arith.constant 0 : i32
    %c0_i32_2 = arith.constant 0 : i32
    return %arg1, %c0_i32, %c0_i32_0, %c0_i32_1 : i32, i32, i32, i32
  }
  func.func @transform_3(%arg0: i32, %arg1: i32) -> (i32, i32, i32, i32) {
    %c0_i32 = arith.constant 0 : i32
    %c0_i32_0 = arith.constant 0 : i32
    %c0_i32_1 = arith.constant 0 : i32
    %c0_i32_2 = arith.constant 0 : i32
    return %arg1, %c0_i32, %c0_i32_0, %c0_i32_1 : i32, i32, i32, i32
  }
  func.func @transform_4(%arg0: i32, %arg1: i32) -> (i32, i32, i32, i32) {
    %c0_i32 = arith.constant 0 : i32
    %c0_i32_0 = arith.constant 0 : i32
    %c0_i32_1 = arith.constant 0 : i32
    return %arg1, %c0_i32, %arg0, %c0_i32_0 : i32, i32, i32, i32
  }
  func.func @transform_5(%arg0: i32, %arg1: i32) -> (i32, i32, i32) {
    %c0_i32 = arith.constant 0 : i32
    %c0_i32_0 = arith.constant 0 : i32
    %c0_i32_1 = arith.constant 0 : i32
    return %c0_i32, %arg0, %c0_i32_0 : i32, i32, i32
  }
  func.func @transform_6(%arg0: i32, %arg1: i32) -> (i32, i32, i32) {
    %c0_i32 = arith.constant 0 : i32
    %c0_i32_0 = arith.constant 0 : i32
    %c0_i32_1 = arith.constant 0 : i32
    return %c0_i32, %arg0, %c0_i32_0 : i32, i32, i32
  }
}

module attributes {stable_mosaic.version = 11 : i64} {
  func.func @_ff_kernel(%arg0: i32, %arg1: memref<16x32xf32, #tpu.memory_space<vmem>>, %arg2: memref<4x16x8xbf16, #tpu.memory_space<vmem>>, %arg3: memref<32x128xbf16, #tpu.memory_space<vmem>>, %arg4: memref<1x128xf32, #tpu.memory_space<vmem>>, %arg5: memref<128x32xbf16, #tpu.memory_space<vmem>>, %arg6: memref<1x32xf32, #tpu.memory_space<vmem>>, %arg7: memref<1x32xf32, #tpu.memory_space<vmem>>, %arg8: memref<1x32xf32, #tpu.memory_space<vmem>>, %arg9: memref<1x32xf32, #tpu.memory_space<vmem>>, %arg10: memref<1x32xf32, #tpu.memory_space<vmem>>, %arg11: memref<16x32xf32, #tpu.memory_space<vmem>>) attributes {dimension_semantics = [#tpu.dimension_semantics<parallel>], iteration_bounds = array<i64: 1>, scalar_prefetch = 0 : i64, scratch_operands = 0 : i64, tpu.core_type = #tpu.core_type<tc>, window_params = [{transform_indices = @transform_0, window_bounds = array<i64: 16, 32>}, {transform_indices = @transform_1, window_bounds = array<i64: 4, 16, 8>}, {pipeline_mode = #tpu.pipeline_mode<synchronous>, transform_indices = @transform_2, window_bounds = array<i64: 32, 128>}, {pipeline_mode = #tpu.pipeline_mode<synchronous>, transform_indices = @transform_3, window_bounds = array<i64: 1, 128>}, {pipeline_mode = #tpu.pipeline_mode<synchronous>, transform_indices = @transform_4, window_bounds = array<i64: 128, 32>}, {pipeline_mode = #tpu.pipeline_mode<synchronous>, transform_indices = @transform_5, window_bounds = array<i64: 1, 32>}, {pipeline_mode = #tpu.pipeline_mode<synchronous>, transform_indices = @transform_6, window_bounds = array<i64: 1, 32>}, {pipeline_mode = #tpu.pipeline_mode<synchronous>, transform_indices = @transform_7, window_bounds = array<i64: 1, 32>}, {pipeline_mode = #tpu.pipeline_mode<synchronous>, transform_indices = @transform_8, window_bounds = array<i64: 1, 32>}, {pipeline_mode = #tpu.pipeline_mode<synchronous>, transform_indices = @transform_9, window_bounds = array<i64: 1, 32>}, {transform_indices = @transform_10, window_bounds = array<i64: 16, 32>}]} {
    %c0 = arith.constant 0 : index
    %c0_0 = arith.constant 0 : index
    %0 = vector.load %arg1[%c0, %c0_0] : memref<16x32xf32, #tpu.memory_space<vmem>>, vector<16x32xf32>
    %c0_1 = arith.constant 0 : index
    %c0_2 = arith.constant 0 : index
    %c0_3 = arith.constant 0 : index
    %1 = vector.load %arg2[%c0_1, %c0_2, %c0_3] : memref<4x16x8xbf16, #tpu.memory_space<vmem>>, vector<1x16x8xbf16>
    %2 = vector.shape_cast %1 : vector<1x16x8xbf16> to vector<16x8xbf16>
    %c1 = arith.constant 1 : index
    %c0_4 = arith.constant 0 : index
    %c0_5 = arith.constant 0 : index
    %3 = vector.load %arg2[%c1, %c0_4, %c0_5] : memref<4x16x8xbf16, #tpu.memory_space<vmem>>, vector<1x16x8xbf16>
    %4 = vector.shape_cast %3 : vector<1x16x8xbf16> to vector<16x8xbf16>
    %c2 = arith.constant 2 : index
    %c0_6 = arith.constant 0 : index
    %c0_7 = arith.constant 0 : index
    %5 = vector.load %arg2[%c2, %c0_6, %c0_7] : memref<4x16x8xbf16, #tpu.memory_space<vmem>>, vector<1x16x8xbf16>
    %6 = vector.shape_cast %5 : vector<1x16x8xbf16> to vector<16x8xbf16>
    %c3 = arith.constant 3 : index
    %c0_8 = arith.constant 0 : index
    %c0_9 = arith.constant 0 : index
    %7 = vector.load %arg2[%c3, %c0_8, %c0_9] : memref<4x16x8xbf16, #tpu.memory_space<vmem>>, vector<1x16x8xbf16>
    %8 = vector.shape_cast %7 : vector<1x16x8xbf16> to vector<16x8xbf16>
    %9 = tpu.concatenate %2, %4, %6, %8 in 1 : vector<16x8xbf16>, vector<16x8xbf16>, vector<16x8xbf16>, vector<16x8xbf16> -> vector<16x32xbf16>
    %10 = arith.extf %9 : vector<16x32xbf16> to vector<16x32xf32>
    %11 = arith.addf %0, %10 : vector<16x32xf32>
    %c0_10 = arith.constant 0 : index
    %c0_11 = arith.constant 0 : index
    %12 = vector.load %arg7[%c0_10, %c0_11] : memref<1x32xf32, #tpu.memory_space<vmem>>, vector<1x32xf32>
    %13 = vector.shape_cast %12 : vector<1x32xf32> to vector<32xf32>
    %c0_12 = arith.constant 0 : index
    %c0_13 = arith.constant 0 : index
    %14 = vector.load %arg8[%c0_12, %c0_13] : memref<1x32xf32, #tpu.memory_space<vmem>>, vector<1x32xf32>
    %15 = vector.shape_cast %14 : vector<1x32xf32> to vector<32xf32>
    %cst = arith.constant dense<0.000000e+00> : vector<16xf32>
    %16 = vector.multi_reduction <add>, %11, %cst [1] : vector<16x32xf32> to vector<16xf32>
    %17 = vector.shape_cast %16 : vector<16xf32> to vector<16x1xf32>
    %cst_14 = arith.constant 3.200000e+01 : f32
    %18 = vector.broadcast %cst_14 : f32 to vector<16x1xf32>
    %19 = arith.divf %17, %18 : vector<16x1xf32>
    %20 = vector.broadcast %19 : vector<16x1xf32> to vector<16x32xf32>
    %21 = arith.subf %11, %20 : vector<16x32xf32>
    %22 = arith.mulf %21, %21 : vector<16x32xf32>
    %cst_15 = arith.constant dense<0.000000e+00> : vector<16xf32>
    %23 = vector.multi_reduction <add>, %22, %cst_15 [1] : vector<16x32xf32> to vector<16xf32>
    %24 = vector.shape_cast %23 : vector<16xf32> to vector<16x1xf32>
    %cst_16 = arith.constant 3.200000e+01 : f32
    %25 = vector.broadcast %cst_16 : f32 to vector<16x1xf32>
    %26 = arith.divf %24, %25 : vector<16x1xf32>
    %27 = vector.broadcast %19 : vector<16x1xf32> to vector<16x32xf32>
    %28 = arith.subf %11, %27 : vector<16x32xf32>
    %cst_17 = arith.constant 9.99999974E-6 : f32
    %29 = vector.broadcast %cst_17 : f32 to vector<16x1xf32>
    %30 = arith.addf %26, %29 : vector<16x1xf32>
    %31 = math.rsqrt %30 : vector<16x1xf32>
    %32 = vector.broadcast %31 : vector<16x1xf32> to vector<16x32xf32>
    %33 = arith.mulf %28, %32 : vector<16x32xf32>
    %34 = vector.shape_cast %13 : vector<32xf32> to vector<1x32xf32>
    %35 = vector.broadcast %34 : vector<1x32xf32> to vector<16x32xf32>
    %36 = arith.mulf %33, %35 : vector<16x32xf32>
    %37 = vector.shape_cast %15 : vector<32xf32> to vector<1x32xf32>
    %38 = vector.broadcast %37 : vector<1x32xf32> to vector<16x32xf32>
    %39 = arith.addf %36, %38 : vector<16x32xf32>
    %40 = arith.truncf %39 : vector<16x32xf32> to vector<16x32xbf16>
    %c0_18 = arith.constant 0 : index
    %c0_19 = arith.constant 0 : index
    %41 = vector.load %arg3[%c0_18, %c0_19] : memref<32x128xbf16, #tpu.memory_space<vmem>>, vector<32x128xbf16>
    %cst_20 = arith.constant dense<0.000000e+00> : vector<16x128xf32>
    %42 = tpu.matmul %40, %41, %cst_20 {dimension_numbers = #tpu.dot_dimension_numbers<[1], [0], [0], [1], [0, 0, 1, 1], [], []>} : vector<16x32xbf16>, vector<32x128xbf16>, vector<16x128xf32> -> vector<16x128xf32>
    %c0_21 = arith.constant 0 : index
    %c0_22 = arith.constant 0 : index
    %43 = vector.load %arg4[%c0_21, %c0_22] : memref<1x128xf32, #tpu.memory_space<vmem>>, vector<1x128xf32>
    %44 = vector.shape_cast %43 : vector<1x128xf32> to vector<128xf32>
    %45 = vector.shape_cast %44 : vector<128xf32> to vector<1x128xf32>
    %46 = vector.broadcast %45 : vector<1x128xf32> to vector<16x128xf32>
    %47 = arith.addf %42, %46 : vector<16x128xf32>
    %cst_23 = arith.constant 5.000000e-01 : f32
    %48 = vector.broadcast %cst_23 : f32 to vector<16x128xf32>
    %49 = arith.mulf %48, %47 : vector<16x128xf32>
    %cst_24 = arith.constant 0.707106769 : f32
    %50 = vector.broadcast %cst_24 : f32 to vector<16x128xf32>
    %51 = arith.mulf %47, %50 : vector<16x128xf32>
    %52 = math.absf %51 : vector<16x128xf32>
    %cst_25 = arith.constant 0.327591091 : f32
    %53 = vector.broadcast %cst_25 : f32 to vector<16x128xf32>
    %54 = arith.mulf %53, %52 : vector<16x128xf32>
    %cst_26 = arith.constant 1.000000e+00 : f32
    %55 = vector.broadcast %cst_26 : f32 to vector<16x128xf32>
    %56 = arith.addf %55, %54 : vector<16x128xf32>
    %cst_27 = arith.constant 1.000000e+00 : f32
    %57 = vector.broadcast %cst_27 : f32 to vector<16x128xf32>
    %58 = arith.divf %57, %56 : vector<16x128xf32>
    %cst_28 = arith.constant 1.06140542 : f32
    %59 = vector.broadcast %cst_28 : f32 to vector<16x128xf32>
    %60 = arith.mulf %59, %58 : vector<16x128xf32>
    %cst_29 = arith.constant -1.45315206 : f32
    %61 = vector.broadcast %cst_29 : f32 to vector<16x128xf32>
    %62 = arith.addf %60, %61 : vector<16x128xf32>
    %63 = arith.mulf %62, %58 : vector<16x128xf32>
    %cst_30 = arith.constant 1.42141378 : f32
    %64 = vector.broadcast %cst_30 : f32 to vector<16x128xf32>
    %65 = arith.addf %63, %64 : vector<16x128xf32>
    %66 = arith.mulf %65, %58 : vector<16x128xf32>
    %cst_31 = arith.constant -0.284496725 : f32
    %67 = vector.broadcast %cst_31 : f32 to vector<16x128xf32>
    %68 = arith.addf %66, %67 : vector<16x128xf32>
    %69 = arith.mulf %68, %58 : vector<16x128xf32>
    %cst_32 = arith.constant 0.254829586 : f32
    %70 = vector.broadcast %cst_32 : f32 to vector<16x128xf32>
    %71 = arith.addf %69, %70 : vector<16x128xf32>
    %72 = arith.mulf %71, %58 : vector<16x128xf32>
    %cst_33 = arith.constant 0.000000e+00 : f32
    %73 = vector.broadcast %cst_33 : f32 to vector<16x128xf32>
    %74 = arith.subf %73, %52 : vector<16x128xf32>
    %75 = arith.mulf %74, %52 : vector<16x128xf32>
    %76 = math.exp %75 : vector<16x128xf32>
    %77 = arith.mulf %72, %76 : vector<16x128xf32>
    %cst_34 = arith.constant 1.000000e+00 : f32
    %78 = vector.broadcast %cst_34 : f32 to vector<16x128xf32>
    %79 = arith.subf %78, %77 : vector<16x128xf32>
    %cst_35 = arith.constant 0.000000e+00 : f32
    %80 = vector.broadcast %cst_35 : f32 to vector<16x128xf32>
    %81 = arith.cmpf oge, %51, %80 : vector<16x128xf32>
    %cst_36 = arith.constant 0.000000e+00 : f32
    %82 = vector.broadcast %cst_36 : f32 to vector<16x128xf32>
    %83 = arith.subf %82, %79 : vector<16x128xf32>
    %84 = arith.select %81, %79, %83 : vector<16x128xi1>, vector<16x128xf32>
    %cst_37 = arith.constant 1.000000e+00 : f32
    %85 = vector.broadcast %cst_37 : f32 to vector<16x128xf32>
    %86 = arith.addf %85, %84 : vector<16x128xf32>
    %87 = arith.mulf %49, %86 : vector<16x128xf32>
    %88 = arith.truncf %87 : vector<16x128xf32> to vector<16x128xbf16>
    %c0_38 = arith.constant 0 : index
    %c0_39 = arith.constant 0 : index
    %89 = vector.load %arg5[%c0_38, %c0_39] : memref<128x32xbf16, #tpu.memory_space<vmem>>, vector<128x32xbf16>
    %cst_40 = arith.constant dense<0.000000e+00> : vector<16x32xf32>
    %90 = tpu.matmul %88, %89, %cst_40 {dimension_numbers = #tpu.dot_dimension_numbers<[1], [0], [0], [1], [0, 0, 1, 1], [], []>} : vector<16x128xbf16>, vector<128x32xbf16>, vector<16x32xf32> -> vector<16x32xf32>
    %c0_41 = arith.constant 0 : index
    %c0_42 = arith.constant 0 : index
    %91 = vector.load %arg6[%c0_41, %c0_42] : memref<1x32xf32, #tpu.memory_space<vmem>>, vector<1x32xf32>
    %92 = vector.shape_cast %91 : vector<1x32xf32> to vector<32xf32>
    %93 = vector.shape_cast %92 : vector<32xf32> to vector<1x32xf32>
    %94 = vector.broadcast %93 : vector<1x32xf32> to vector<16x32xf32>
    %95 = arith.addf %90, %94 : vector<16x32xf32>
    %96 = arith.addf %39, %95 : vector<16x32xf32>
    %c0_43 = arith.constant 0 : index
    %c0_44 = arith.constant 0 : index
    %97 = vector.load %arg9[%c0_43, %c0_44] : memref<1x32xf32, #tpu.memory_space<vmem>>, vector<1x32xf32>
    %98 = vector.shape_cast %97 : vector<1x32xf32> to vector<32xf32>
    %c0_45 = arith.constant 0 : index
    %c0_46 = arith.constant 0 : index
    %99 = vector.load %arg10[%c0_45, %c0_46] : memref<1x32xf32, #tpu.memory_space<vmem>>, vector<1x32xf32>
    %100 = vector.shape_cast %99 : vector<1x32xf32> to vector<32xf32>
    %cst_47 = arith.constant dense<0.000000e+00> : vector<16xf32>
    %101 = vector.multi_reduction <add>, %96, %cst_47 [1] : vector<16x32xf32> to vector<16xf32>
    %102 = vector.shape_cast %101 : vector<16xf32> to vector<16x1xf32>
    %cst_48 = arith.constant 3.200000e+01 : f32
    %103 = vector.broadcast %cst_48 : f32 to vector<16x1xf32>
    %104 = arith.divf %102, %103 : vector<16x1xf32>
    %105 = vector.broadcast %104 : vector<16x1xf32> to vector<16x32xf32>
    %106 = arith.subf %96, %105 : vector<16x32xf32>
    %107 = arith.mulf %106, %106 : vector<16x32xf32>
    %cst_49 = arith.constant dense<0.000000e+00> : vector<16xf32>
    %108 = vector.multi_reduction <add>, %107, %cst_49 [1] : vector<16x32xf32> to vector<16xf32>
    %109 = vector.shape_cast %108 : vector<16xf32> to vector<16x1xf32>
    %cst_50 = arith.constant 3.200000e+01 : f32
    %110 = vector.broadcast %cst_50 : f32 to vector<16x1xf32>
    %111 = arith.divf %109, %110 : vector<16x1xf32>
    %112 = vector.broadcast %104 : vector<16x1xf32> to vector<16x32xf32>
    %113 = arith.subf %96, %112 : vector<16x32xf32>
    %cst_51 = arith.constant 9.99999974E-6 : f32
    %114 = vector.broadcast %cst_51 : f32 to vector<16x1xf32>
    %115 = arith.addf %111, %114 : vector<16x1xf32>
    %116 = math.rsqrt %115 : vector<16x1xf32>
    %117 = vector.broadcast %116 : vector<16x1xf32> to vector<16x32xf32>
    %118 = arith.mulf %113, %117 : vector<16x32xf32>
    %119 = vector.shape_cast %98 : vector<32xf32> to vector<1x32xf32>
    %120 = vector.broadcast %119 : vector<1x32xf32> to vector<16x32xf32>
    %121 = arith.mulf %118, %120 : vector<16x32xf32>
    %122 = vector.shape_cast %100 : vector<32xf32> to vector<1x32xf32>
    %123 = vector.broadcast %122 : vector<1x32xf32> to vector<16x32xf32>
    %124 = arith.addf %121, %123 : vector<16x32xf32>
    %c0_52 = arith.constant 0 : index
    %c0_53 = arith.constant 0 : index
    %125 = vector.load %arg11[%c0_52, %c0_53] : memref<16x32xf32, #tpu.memory_space<vmem>>, vector<16x32xf32>
    tpu.vector_store %arg11[%c0_52, %c0_53], %124 {strides = array<i32>} : memref<16x32xf32, #tpu.memory_space<vmem>>, vector<16x32xf32>,
    return
  }
  func.func @transform_0(%arg0: i32) -> (i32, i32) {
    %c0_i32 = arith.constant 0 : i32
    %c0_i32_0 = arith.constant 0 : i32
    return %arg0, %c0_i32 : i32, i32
  }
  func.func @transform_1(%arg0: i32) -> (i32, i32, i32) {
    %c0_i32 = arith.constant 0 : i32
    %c0_i32_0 = arith.constant 0 : i32
    %c0_i32_1 = arith.constant 0 : i32
    return %c0_i32, %arg0, %c0_i32_0 : i32, i32, i32
  }
  func.func @transform_2(%arg0: i32) -> (i32, i32) {
    %c0_i32 = arith.constant 0 : i32
    %c0_i32_0 = arith.constant 0 : i32
    %c0_i32_1 = arith.constant 0 : i32
    return %c0_i32, %c0_i32_0 : i32, i32
  }
  func.func @transform_3(%arg0: i32) -> (i32, i32) {
    %c0_i32 = arith.constant 0 : i32
    %c0_i32_0 = arith.constant 0 : i32
    %c0_i32_1 = arith.constant 0 : i32
    return %c0_i32, %c0_i32_0 : i32, i32
  }
  func.func @transform_4(%arg0: i32) -> (i32, i32) {
    %c0_i32 = arith.constant 0 : i32
    %c0_i32_0 = arith.constant 0 : i32
    %c0_i32_1 = arith.constant 0 : i32
    return %c0_i32, %c0_i32_0 : i32, i32
  }
  func.func @transform_5(%arg0: i32) -> (i32, i32) {
    %c0_i32 = arith.constant 0 : i32
    %c0_i32_0 = arith.constant 0 : i32
    %c0_i32_1 = arith.constant 0 : i32
    return %c0_i32, %c0_i32_0 : i32, i32
  }
  func.func @transform_6(%arg0: i32) -> (i32, i32) {
    %c0_i32 = arith.constant 0 : i32
    %c0_i32_0 = arith.constant 0 : i32
    %c0_i32_1 = arith.constant 0 : i32
    return %c0_i32, %c0_i32_0 : i32, i32
  }
  func.func @transform_7(%arg0: i32) -> (i32, i32) {
    %c0_i32 = arith.constant 0 : i32
    %c0_i32_0 = arith.constant 0 : i32
    %c0_i32_1 = arith.constant 0 : i32
    return %c0_i32, %c0_i32_0 : i32, i32
  }
  func.func @transform_8(%arg0: i32) -> (i32, i32) {
    %c0_i32 = arith.constant 0 : i32
    %c0_i32_0 = arith.constant 0 : i32
    %c0_i32_1 = arith.constant 0 : i32
    return %c0_i32, %c0_i32_0 : i32, i32
  }
  func.func @transform_9(%arg0: i32) -> (i32, i32) {
    %c0_i32 = arith.constant 0 : i32
    %c0_i32_0 = arith.constant 0 : i32
    %c0_i32_1 = arith.constant 0 : i32
    return %c0_i32, %c0_i32_0 : i32, i32
  }
  func.func @transform_10(%arg0: i32) -> (i32, i32) {
    %c0_i32 = arith.constant 0 : i32
    %c0_i32_0 = arith.constant 0 : i32
    return %arg0, %c0_i32 : i32, i32
  }
}

module attributes {stable_mosaic.version = 11 : i64} {
  func.func @_ff_kernel(%arg0: i32, %arg1: memref<16x32xf32, #tpu.memory_space<vmem>>, %arg2: memref<4x16x8xbf16, #tpu.memory_space<vmem>>, %arg3: memref<32x128xbf16, #tpu.memory_space<vmem>>, %arg4: memref<1x128xf32, #tpu.memory_space<vmem>>, %arg5: memref<128x32xbf16, #tpu.memory_space<vmem>>, %arg6: memref<1x32xf32, #tpu.memory_space<vmem>>, %arg7: memref<1x32xf32, #tpu.memory_space<vmem>>, %arg8: memref<1x32xf32, #tpu.memory_space<vmem>>, %arg9: memref<1x32xf32, #tpu.memory_space<vmem>>, %arg10: memref<1x32xf32, #tpu.memory_space<vmem>>, %arg11: memref<16x32xf32, #tpu.memory_space<vmem>>) attributes {dimension_semantics = [#tpu.dimension_semantics<parallel>], iteration_bounds = array<i64: 1>, scalar_prefetch = 0 : i64, scratch_operands = 0 : i64, tpu.core_type = #tpu.core_type<tc>, window_params = [{transform_indices = @transform_0, window_bounds = array<i64: 16, 32>}, {transform_indices = @transform_1, window_bounds = array<i64: 4, 16, 8>}, {pipeline_mode = #tpu.pipeline_mode<synchronous>, transform_indices = @transform_2, window_bounds = array<i64: 32, 128>}, {pipeline_mode = #tpu.pipeline_mode<synchronous>, transform_indices = @transform_3, window_bounds = array<i64: 1, 128>}, {pipeline_mode = #tpu.pipeline_mode<synchronous>, transform_indices = @transform_4, window_bounds = array<i64: 128, 32>}, {pipeline_mode = #tpu.pipeline_mode<synchronous>, transform_indices = @transform_5, window_bounds = array<i64: 1, 32>}, {pipeline_mode = #tpu.pipeline_mode<synchronous>, transform_indices = @transform_6, window_bounds = array<i64: 1, 32>}, {pipeline_mode = #tpu.pipeline_mode<synchronous>, transform_indices = @transform_7, window_bounds = array<i64: 1, 32>}, {pipeline_mode = #tpu.pipeline_mode<synchronous>, transform_indices = @transform_8, window_bounds = array<i64: 1, 32>}, {pipeline_mode = #tpu.pipeline_mode<synchronous>, transform_indices = @transform_9, window_bounds = array<i64: 1, 32>}, {transform_indices = @transform_10, window_bounds = array<i64: 16, 32>}]} {
    %c0 = arith.constant 0 : index
    %c0_0 = arith.constant 0 : index
    %0 = vector.load %arg1[%c0, %c0_0] : memref<16x32xf32, #tpu.memory_space<vmem>>, vector<16x32xf32>
    %c0_1 = arith.constant 0 : index
    %c0_2 = arith.constant 0 : index
    %c0_3 = arith.constant 0 : index
    %1 = vector.load %arg2[%c0_1, %c0_2, %c0_3] : memref<4x16x8xbf16, #tpu.memory_space<vmem>>, vector<1x16x8xbf16>
    %2 = vector.shape_cast %1 : vector<1x16x8xbf16> to vector<16x8xbf16>
    %c1 = arith.constant 1 : index
    %c0_4 = arith.constant 0 : index
    %c0_5 = arith.constant 0 : index
    %3 = vector.load %arg2[%c1, %c0_4, %c0_5] : memref<4x16x8xbf16, #tpu.memory_space<vmem>>, vector<1x16x8xbf16>
    %4 = vector.shape_cast %3 : vector<1x16x8xbf16> to vector<16x8xbf16>
    %c2 = arith.constant 2 : index
    %c0_6 = arith.constant 0 : index
    %c0_7 = arith.constant 0 : index
    %5 = vector.load %arg2[%c2, %c0_6, %c0_7] : memref<4x16x8xbf16, #tpu.memory_space<vmem>>, vector<1x16x8xbf16>
    %6 = vector.shape_cast %5 : vector<1x16x8xbf16> to vector<16x8xbf16>
    %c3 = arith.constant 3 : index
    %c0_8 = arith.constant 0 : index
    %c0_9 = arith.constant 0 : index
    %7 = vector.load %arg2[%c3, %c0_8, %c0_9] : memref<4x16x8xbf16, #tpu.memory_space<vmem>>, vector<1x16x8xbf16>
    %8 = vector.shape_cast %7 : vector<1x16x8xbf16> to vector<16x8xbf16>
    %9 = tpu.concatenate %2, %4, %6, %8 in 1 : vector<16x8xbf16>, vector<16x8xbf16>, vector<16x8xbf16>, vector<16x8xbf16> -> vector<16x32xbf16>
    %10 = arith.extf %9 : vector<16x32xbf16> to vector<16x32xf32>
    %11 = arith.addf %0, %10 : vector<16x32xf32>
    %c0_10 = arith.constant 0 : index
    %c0_11 = arith.constant 0 : index
    %12 = vector.load %arg7[%c0_10, %c0_11] : memref<1x32xf32, #tpu.memory_space<vmem>>, vector<1x32xf32>
    %13 = vector.shape_cast %12 : vector<1x32xf32> to vector<32xf32>
    %c0_12 = arith.constant 0 : index
    %c0_13 = arith.constant 0 : index
    %14 = vector.load %arg8[%c0_12, %c0_13] : memref<1x32xf32, #tpu.memory_space<vmem>>, vector<1x32xf32>
    %15 = vector.shape_cast %14 : vector<1x32xf32> to vector<32xf32>
    %cst = arith.constant dense<0.000000e+00> : vector<16xf32>
    %16 = vector.multi_reduction <add>, %11, %cst [1] : vector<16x32xf32> to vector<16xf32>
    %17 = vector.shape_cast %16 : vector<16xf32> to vector<16x1xf32>
    %cst_14 = arith.constant 3.200000e+01 : f32
    %18 = vector.broadcast %cst_14 : f32 to vector<16x1xf32>
    %19 = arith.divf %17, %18 : vector<16x1xf32>
    %20 = vector.broadcast %19 : vector<16x1xf32> to vector<16x32xf32>
    %21 = arith.subf %11, %20 : vector<16x32xf32>
    %22 = arith.mulf %21, %21 : vector<16x32xf32>
    %cst_15 = arith.constant dense<0.000000e+00> : vector<16xf32>
    %23 = vector.multi_reduction <add>, %22, %cst_15 [1] : vector<16x32xf32> to vector<16xf32>
    %24 = vector.shape_cast %23 : vector<16xf32> to vector<16x1xf32>
    %cst_16 = arith.constant 3.200000e+01 : f32
    %25 = vector.broadcast %cst_16 : f32 to vector<16x1xf32>
    %26 = arith.divf %24, %25 : vector<16x1xf32>
    %27 = vector.broadcast %19 : vector<16x1xf32> to vector<16x32xf32>
    %28 = arith.subf %11, %27 : vector<16x32xf32>
    %cst_17 = arith.constant 9.99999974E-6 : f32
    %29 = vector.broadcast %cst_17 : f32 to vector<16x1xf32>
    %30 = arith.addf %26, %29 : vector<16x1xf32>
    %31 = math.rsqrt %30 : vector<16x1xf32>
    %32 = vector.broadcast %31 : vector<16x1xf32> to vector<16x32xf32>
    %33 = arith.mulf %28, %32 : vector<16x32xf32>
    %34 = vector.shape_cast %13 : vector<32xf32> to vector<1x32xf32>
    %35 = vector.broadcast %34 : vector<1x32xf32> to vector<16x32xf32>
    %36 = arith.mulf %33, %35 : vector<16x32xf32>
    %37 = vector.shape_cast %15 : vector<32xf32> to vector<1x32xf32>
    %38 = vector.broadcast %37 : vector<1x32xf32> to vector<16x32xf32>
    %39 = arith.addf %36, %38 : vector<16x32xf32>
    %40 = arith.truncf %39 : vector<16x32xf32> to vector<16x32xbf16>
    %c0_18 = arith.constant 0 : index
    %c0_19 = arith.constant 0 : index
    %41 = vector.load %arg3[%c0_18, %c0_19] : memref<32x128xbf16, #tpu.memory_space<vmem>>, vector<32x128xbf16>
    %cst_20 = arith.constant dense<0.000000e+00> : vector<16x128xf32>
    %42 = tpu.matmul %40, %41, %cst_20 {dimension_numbers = #tpu.dot_dimension_numbers<[1], [0], [0], [1], [0, 0, 1, 1], [], []>} : vector<16x32xbf16>, vector<32x128xbf16>, vector<16x128xf32> -> vector<16x128xf32>
    %c0_21 = arith.constant 0 : index
    %c0_22 = arith.constant 0 : index
    %43 = vector.load %arg4[%c0_21, %c0_22] : memref<1x128xf32, #tpu.memory_space<vmem>>, vector<1x128xf32>
    %44 = vector.shape_cast %43 : vector<1x128xf32> to vector<128xf32>
    %45 = vector.shape_cast %44 : vector<128xf32> to vector<1x128xf32>
    %46 = vector.broadcast %45 : vector<1x128xf32> to vector<16x128xf32>
    %47 = arith.addf %42, %46 : vector<16x128xf32>
    %cst_23 = arith.constant 5.000000e-01 : f32
    %48 = vector.broadcast %cst_23 : f32 to vector<16x128xf32>
    %49 = arith.mulf %48, %47 : vector<16x128xf32>
    %cst_24 = arith.constant 0.707106769 : f32
    %50 = vector.broadcast %cst_24 : f32 to vector<16x128xf32>
    %51 = arith.mulf %47, %50 : vector<16x128xf32>
    %52 = math.absf %51 : vector<16x128xf32>
    %cst_25 = arith.constant 0.327591091 : f32
    %53 = vector.broadcast %cst_25 : f32 to vector<16x128xf32>
    %54 = arith.mulf %53, %52 : vector<16x128xf32>
    %cst_26 = arith.constant 1.000000e+00 : f32
    %55 = vector.broadcast %cst_26 : f32 to vector<16x128xf32>
    %56 = arith.addf %55, %54 : vector<16x128xf32>
    %cst_27 = arith.constant 1.000000e+00 : f32
    %57 = vector.broadcast %cst_27 : f32 to vector<16x128xf32>
    %58 = arith.divf %57, %56 : vector<16x128xf32>
    %cst_28 = arith.constant 1.06140542 : f32
    %59 = vector.broadcast %cst_28 : f32 to vector<16x128xf32>
    %60 = arith.mulf %59, %58 : vector<16x128xf32>
    %cst_29 = arith.constant -1.45315206 : f32
    %61 = vector.broadcast %cst_29 : f32 to vector<16x128xf32>
    %62 = arith.addf %60, %61 : vector<16x128xf32>
    %63 = arith.mulf %62, %58 : vector<16x128xf32>
    %cst_30 = arith.constant 1.42141378 : f32
    %64 = vector.broadcast %cst_30 : f32 to vector<16x128xf32>
    %65 = arith.addf %63, %64 : vector<16x128xf32>
    %66 = arith.mulf %65, %58 : vector<16x128xf32>
    %cst_31 = arith.constant -0.284496725 : f32
    %67 = vector.broadcast %cst_31 : f32 to vector<16x128xf32>
    %68 = arith.addf %66, %67 : vector<16x128xf32>
    %69 = arith.mulf %68, %58 : vector<16x128xf32>
    %cst_32 = arith.constant 0.254829586 : f32
    %70 = vector.broadcast %cst_32 : f32 to vector<16x128xf32>
    %71 = arith.addf %69, %70 : vector<16x128xf32>
    %72 = arith.mulf %71, %58 : vector<16x128xf32>
    %cst_33 = arith.constant 0.000000e+00 : f32
    %73 = vector.broadcast %cst_33 : f32 to vector<16x128xf32>
    %74 = arith.subf %73, %52 : vector<16x128xf32>
    %75 = arith.mulf %74, %52 : vector<16x128xf32>
    %76 = math.exp %75 : vector<16x128xf32>
    %77 = arith.mulf %72, %76 : vector<16x128xf32>
    %cst_34 = arith.constant 1.000000e+00 : f32
    %78 = vector.broadcast %cst_34 : f32 to vector<16x128xf32>
    %79 = arith.subf %78, %77 : vector<16x128xf32>
    %cst_35 = arith.constant 0.000000e+00 : f32
    %80 = vector.broadcast %cst_35 : f32 to vector<16x128xf32>
    %81 = arith.cmpf oge, %51, %80 : vector<16x128xf32>
    %cst_36 = arith.constant 0.000000e+00 : f32
    %82 = vector.broadcast %cst_36 : f32 to vector<16x128xf32>
    %83 = arith.subf %82, %79 : vector<16x128xf32>
    %84 = arith.select %81, %79, %83 : vector<16x128xi1>, vector<16x128xf32>
    %cst_37 = arith.constant 1.000000e+00 : f32
    %85 = vector.broadcast %cst_37 : f32 to vector<16x128xf32>
    %86 = arith.addf %85, %84 : vector<16x128xf32>
    %87 = arith.mulf %49, %86 : vector<16x128xf32>
    %88 = arith.truncf %87 : vector<16x128xf32> to vector<16x128xbf16>
    %c0_38 = arith.constant 0 : index
    %c0_39 = arith.constant 0 : index
    %89 = vector.load %arg5[%c0_38, %c0_39] : memref<128x32xbf16, #tpu.memory_space<vmem>>, vector<128x32xbf16>
    %cst_40 = arith.constant dense<0.000000e+00> : vector<16x32xf32>
    %90 = tpu.matmul %88, %89, %cst_40 {dimension_numbers = #tpu.dot_dimension_numbers<[1], [0], [0], [1], [0, 0, 1, 1], [], []>} : vector<16x128xbf16>, vector<128x32xbf16>, vector<16x32xf32> -> vector<16x32xf32>
    %c0_41 = arith.constant 0 : index
    %c0_42 = arith.constant 0 : index
    %91 = vector.load %arg6[%c0_41, %c0_42] : memref<1x32xf32, #tpu.memory_space<vmem>>, vector<1x32xf32>
    %92 = vector.shape_cast %91 : vector<1x32xf32> to vector<32xf32>
    %93 = vector.shape_cast %92 : vector<32xf32> to vector<1x32xf32>
    %94 = vector.broadcast %93 : vector<1x32xf32> to vector<16x32xf32>
    %95 = arith.addf %90, %94 : vector<16x32xf32>
    %96 = arith.addf %39, %95 : vector<16x32xf32>
    %c0_43 = arith.constant 0 : index
    %c0_44 = arith.constant 0 : index
    %97 = vector.load %arg9[%c0_43, %c0_44] : memref<1x32xf32, #tpu.memory_space<vmem>>, vector<1x32xf32>
    %98 = vector.shape_cast %97 : vector<1x32xf32> to vector<32xf32>
    %c0_45 = arith.constant 0 : index
    %c0_46 = arith.constant 0 : index
    %99 = vector.load %arg10[%c0_45, %c0_46] : memref<1x32xf32, #tpu.memory_space<vmem>>, vector<1x32xf32>
    %100 = vector.shape_cast %99 : vector<1x32xf32> to vector<32xf32>
    %cst_47 = arith.constant dense<0.000000e+00> : vector<16xf32>
    %101 = vector.multi_reduction <add>, %96, %cst_47 [1] : vector<16x32xf32> to vector<16xf32>
    %102 = vector.shape_cast %101 : vector<16xf32> to vector<16x1xf32>
    %cst_48 = arith.constant 3.200000e+01 : f32
    %103 = vector.broadcast %cst_48 : f32 to vector<16x1xf32>
    %104 = arith.divf %102, %103 : vector<16x1xf32>
    %105 = vector.broadcast %104 : vector<16x1xf32> to vector<16x32xf32>
    %106 = arith.subf %96, %105 : vector<16x32xf32>
    %107 = arith.mulf %106, %106 : vector<16x32xf32>
    %cst_49 = arith.constant dense<0.000000e+00> : vector<16xf32>
    %108 = vector.multi_reduction <add>, %107, %cst_49 [1] : vector<16x32xf32> to vector<16xf32>
    %109 = vector.shape_cast %108 : vector<16xf32> to vector<16x1xf32>
    %cst_50 = arith.constant 3.200000e+01 : f32
    %110 = vector.broadcast %cst_50 : f32 to vector<16x1xf32>
    %111 = arith.divf %109, %110 : vector<16x1xf32>
    %112 = vector.broadcast %104 : vector<16x1xf32> to vector<16x32xf32>
    %113 = arith.subf %96, %112 : vector<16x32xf32>
    %cst_51 = arith.constant 9.99999974E-6 : f32
    %114 = vector.broadcast %cst_51 : f32 to vector<16x1xf32>
    %115 = arith.addf %111, %114 : vector<16x1xf32>
    %116 = math.rsqrt %115 : vector<16x1xf32>
    %117 = vector.broadcast %116 : vector<16x1xf32> to vector<16x32xf32>
    %118 = arith.mulf %113, %117 : vector<16x32xf32>
    %119 = vector.shape_cast %98 : vector<32xf32> to vector<1x32xf32>
    %120 = vector.broadcast %119 : vector<1x32xf32> to vector<16x32xf32>
    %121 = arith.mulf %118, %120 : vector<16x32xf32>
    %122 = vector.shape_cast %100 : vector<32xf32> to vector<1x32xf32>
    %123 = vector.broadcast %122 : vector<1x32xf32> to vector<16x32xf32>
    %124 = arith.addf %121, %123 : vector<16x32xf32>
    %c0_52 = arith.constant 0 : index
    %c0_53 = arith.constant 0 : index
    %125 = vector.load %arg11[%c0_52, %c0_53] : memref<16x32xf32, #tpu.memory_space<vmem>>, vector<16x32xf32>
    tpu.vector_store %arg11[%c0_52, %c0_53], %124 {strides = array<i32>} : memref<16x32xf32, #tpu.memory_space<vmem>>, vector<16x32xf32>,
    return
  }
  func.func @transform_0(%arg0: i32) -> (i32, i32) {
    %c0_i32 = arith.constant 0 : i32
    %c0_i32_0 = arith.constant 0 : i32
    return %arg0, %c0_i32 : i32, i32
  }
  func.func @transform_1(%arg0: i32) -> (i32, i32, i32) {
    %c0_i32 = arith.constant 0 : i32
    %c0_i32_0 = arith.constant 0 : i32
    %c0_i32_1 = arith.constant 0 : i32
    return %c0_i32, %arg0, %c0_i32_0 : i32, i32, i32
  }
  func.func @transform_2(%arg0: i32) -> (i32, i32) {
    %c0_i32 = arith.constant 0 : i32
    %c0_i32_0 = arith.constant 0 : i32
    %c0_i32_1 = arith.constant 0 : i32
    return %c0_i32, %c0_i32_0 : i32, i32
  }
  func.func @transform_3(%arg0: i32) -> (i32, i32) {
    %c0_i32 = arith.constant 0 : i32
    %c0_i32_0 = arith.constant 0 : i32
    %c0_i32_1 = arith.constant 0 : i32
    return %c0_i32, %c0_i32_0 : i32, i32
  }
  func.func @transform_4(%arg0: i32) -> (i32, i32) {
    %c0_i32 = arith.constant 0 : i32
    %c0_i32_0 = arith.constant 0 : i32
    %c0_i32_1 = arith.constant 0 : i32
    return %c0_i32, %c0_i32_0 : i32, i32
  }
  func.func @transform_5(%arg0: i32) -> (i32, i32) {
    %c0_i32 = arith.constant 0 : i32
    %c0_i32_0 = arith.constant 0 : i32
    %c0_i32_1 = arith.constant 0 : i32
    return %c0_i32, %c0_i32_0 : i32, i32
  }
  func.func @transform_6(%arg0: i32) -> (i32, i32) {
    %c0_i32 = arith.constant 0 : i32
    %c0_i32_0 = arith.constant 0 : i32
    %c0_i32_1 = arith.constant 0 : i32
    return %c0_i32, %c0_i32_0 : i32, i32
  }
  func.func @transform_7(%arg0: i32) -> (i32, i32) {
    %c0_i32 = arith.constant 0 : i32
    %c0_i32_0 = arith.constant 0 : i32
    %c0_i32_1 = arith.constant 0 : i32
    return %c0_i32, %c0_i32_0 : i32, i32
  }
  func.func @transform_8(%arg0: i32) -> (i32, i32) {
    %c0_i32 = arith.constant 0 : i32
    %c0_i32_0 = arith.constant 0 : i32
    %c0_i32_1 = arith.constant 0 : i32
    return %c0_i32, %c0_i32_0 : i32, i32
  }
  func.func @transform_9(%arg0: i32) -> (i32, i32) {
    %c0_i32 = arith.constant 0 : i32
    %c0_i32_0 = arith.constant 0 : i32
    %c0_i32_1 = arith.constant 0 : i32
    return %c0_i32, %c0_i32_0 : i32, i32
  }
  func.func @transform_10(%arg0: i32) -> (i32, i32) {
    %c0_i32 = arith.constant 0 : i32
    %c0_i32_0 = arith.constant 0 : i32
    return %arg0, %c0_i32 : i32, i32
  }
}

</mosaic_0001>

<llo_original>
// kernel: _lambda_.4
$region0: #{_lambda_.4}
  #allocation0 [shape = 'u32[]', space=smem, size = 0x4, offset = 0x4, fixed_abs, tag = 'smem constant byte address 0x4 - core index']
  #allocation1 [shape = 'u32[72,128]{1,0:T(1,128)}', space=vmem, size = 0x9000, scoped, tag = 'internal scratch']
  %s0 = inlined_call_operand.vmem [shape: f32[4,2,8,8], index: 0, kind: input, shape index: {}]
  %s1 = inlined_call_operand.vmem [shape: f32[4,2,8,1], index: 1, kind: input, shape index: {}]
  %s2 = inlined_call_operand.vmem [shape: bf16[4,2,8,8], index: 2, kind: input, shape index: {}]
  %s3 = inlined_call_operand.vmem [shape: bf16[4,2,8,8], index: 3, kind: input, shape index: {}]
  %s4 = inlined_call_operand.vmem [shape: bf16[4,2,8,8], index: 4, kind: output, shape index: {0}]
  %s5 = inlined_call_operand.hbm [shape: f32[2,8,8], index: 5, kind: output, shape index: {1}]
  %s6 = inlined_call_operand.hbm [shape: f32[2,8,8], index: 6, kind: output, shape index: {2}]
  %7 = xla_tuple %s4, %s5, %s6
  %s8 = sld [smem:[#allocation0]]
  $region69: #{_lambda_.4} parent=0
    _
  %s10 = ssub.s32 1, %s8
  %s11 = scalar_select 0, %s10, %s8
  $region1: #{_lambda_.4} parent=0
    #allocation2 [shape = 'u8[8192]{0}', space=vmem, size = 0x2000, scoped, tag = 'output window, operand 1, single buffered']
    #allocation3 [shape = 's32[2]{0}', space=sflag, size = 0x8, scoped, tag = 'scoped memory for _lambda_.4']
    #allocation4 [shape = 'u8[8192]{0}', space=vmem, size = 0x2000, scoped, tag = 'output window, operand 2, single buffered']
    #allocation5 [shape = 's32[1]{0}', space=sflag, size = 0x4, scoped, tag = 'scoped memory for _lambda_.4']
    %12 = vsyncpa [#allocation3], 0
    %13 = vsyncpa [#allocation5], 0
    loop: start=0, step=1, limit=6
    $region2: #{_lambda_.4} parent=1 // loop_pre_header
      _
    $region3: #{_lambda_.4} parent=1 // loop_header
      %s15 = sphi 0, %s19
      %p16 = scmp.ge.s32.totalorder %s15, 6
      %s22 = sphi 0, %s34
      %s23 = sphi 0, %s30
      %s24 = sphi 0, %s22
      %s25 = sphi 0, %s23
      %s26 = sphi 0, %s24
      %s27 = sphi 0, %s25
      %s39 = sphi 0, %s41
      %s42 = sphi 0, %s39
      %s43 = sphi 0, %s42
      %s59 = sphi 0, %s43
      %s67 = sphi 0, %s69
      %s70 = sphi 0, %s67
      %s71 = sphi 0, %s70
      %s87 = sphi 0, %s71
      %s93 = sphi 0, %s95
      %s96 = sphi 0, %s93
      %s97 = sphi 0, %s96
      %s113 = sphi 0, %s97
      %s119 = sphi 0, %s121
      %s122 = sphi 0, %s119
      %s123 = sphi 0, %s122
      %s139 = sphi 0, %s123
      %s147 = sphi 0, %s149
      %s150 = sphi 0, %s147
      %s151 = sphi 0, %s150
      %s167 = sphi 0, %s151
      %s173 = sphi 0, %s175
      %s176 = sphi 0, %s173
      %s177 = sphi 0, %s176
      %s193 = sphi 0, %s177
      %s199 = sphi 0, %s201
      %s202 = sphi 0, %s199
      %s203 = sphi 0, %s202
      %s219 = sphi 0, %s203
    $region4: #{_lambda_.4} parent=1 // loop_header_branch
      %18 = sbr.rel (%p16) target = $region8
    $region5: #{_lambda_.4} parent=1 // loop_body
      %s20 = ssub.s32 %s15, 1
      %s21 = ssub.s32 %s15, 2
      %s28 = sadd.s32 1, %s23
      %p29 = scmp.ge.s32.totalorder %s28, 4
      %s30 = scalar_select %p29, 0, %s28
      %s31 = sadd.s32 1, %s22
      %s32 = scalar_select %p29, %s31, %s22
      %p33 = scmp.ge.s32.totalorder %s32, 1
      %s34 = scalar_select %p33, 0, %s32
      %s35 = ssub.s32 %s23, %s30
      %s36 = ssub.s32 %s22, %s34
      %s37 = sor.u32 %s35, %s36
      %p38 = scmp.eq.s32.totalorder %s37, 0
      %s40 = sadd.s32 %s39, 1
      %s41 = scalar_select %p38, %s39, %s40
      %p44 = pneg %p38
      %p45 = scmp.eq.s32.totalorder %s15, 3
      %p46 = por %p44, %p45
      %p47 = scmp.ne.s32.totalorder %s39, %s42
      %p48 = scmp.eq.s32.totalorder %s15, 0
      %p49 = por %p47, %p48
      %p50 = scmp.ne.s32.totalorder %s39, %s42
      %p51 = scmp.eq.s32.totalorder %s20, 3
      %p52 = por %p50, %p51
      %p53 = scmp.ne.s32.totalorder %s42, %s43
      %p54 = scmp.eq.s32.totalorder %s20, 0
      %p55 = por %p53, %p54
      %p56 = scmp.ne.s32.totalorder %s42, %s43
      %p57 = scmp.eq.s32.totalorder %s21, 3
      %p58 = por %p56, %p57
      %p60 = scmp.ne.s32.totalorder %s43, %s59
      %p61 = scmp.eq.s32.totalorder %s21, 0
      %p62 = por %p60, %p61
      %s63 = ssub.s32 %s23, %s30
      %s64 = ssub.s32 %s22, %s34
      %s65 = sor.u32 %s63, %s64
      %p66 = scmp.eq.s32.totalorder %s65, 0
      %s68 = sadd.s32 %s67, 1
      %s69 = scalar_select %p66, %s67, %s68
      %p72 = pneg %p66
      %p73 = scmp.eq.s32.totalorder %s15, 3
      %p74 = por %p72, %p73
      %p75 = scmp.ne.s32.totalorder %s67, %s70
      %p76 = scmp.eq.s32.totalorder %s15, 0
      %p77 = por %p75, %p76
      %p78 = scmp.ne.s32.totalorder %s67, %s70
      %p79 = scmp.eq.s32.totalorder %s20, 3
      %p80 = por %p78, %p79
      %p81 = scmp.ne.s32.totalorder %s70, %s71
      %p82 = scmp.eq.s32.totalorder %s20, 0
      %p83 = por %p81, %p82
      %p84 = scmp.ne.s32.totalorder %s70, %s71
      %p85 = scmp.eq.s32.totalorder %s21, 3
      %p86 = por %p84, %p85
      %p88 = scmp.ne.s32.totalorder %s71, %s87
      %p89 = scmp.eq.s32.totalorder %s21, 0
      %p90 = por %p88, %p89
      %s91 = ssub.s32 %s23, %s30
      %p92 = scmp.eq.s32.totalorder %s91, 0
      %s94 = sadd.s32 %s93, 1
      %s95 = scalar_select %p92, %s93, %s94
      %p98 = pneg %p92
      %p99 = scmp.eq.s32.totalorder %s15, 3
      %p100 = por %p98, %p99
      %p101 = scmp.ne.s32.totalorder %s93, %s96
      %p102 = scmp.eq.s32.totalorder %s15, 0
      %p103 = por %p101, %p102
      %p104 = scmp.ne.s32.totalorder %s93, %s96
      %p105 = scmp.eq.s32.totalorder %s20, 3
      %p106 = por %p104, %p105
      %p107 = scmp.ne.s32.totalorder %s96, %s97
      %p108 = scmp.eq.s32.totalorder %s20, 0
      %p109 = por %p107, %p108
      %p110 = scmp.ne.s32.totalorder %s96, %s97
      %p111 = scmp.eq.s32.totalorder %s21, 3
      %p112 = por %p110, %p111
      %p114 = scmp.ne.s32.totalorder %s97, %s113
      %p115 = scmp.eq.s32.totalorder %s21, 0
      %p116 = por %p114, %p115
      %s117 = ssub.s32 %s23, %s30
      %p118 = scmp.eq.s32.totalorder %s117, 0
      %s120 = sadd.s32 %s119, 1
      %s121 = scalar_select %p118, %s119, %s120
      %p124 = pneg %p118
      %p125 = scmp.eq.s32.totalorder %s15, 3
      %p126 = por %p124, %p125
      %p127 = scmp.ne.s32.totalorder %s119, %s122
      %p128 = scmp.eq.s32.totalorder %s15, 0
      %p129 = por %p127, %p128
      %p130 = scmp.ne.s32.totalorder %s119, %s122
      %p131 = scmp.eq.s32.totalorder %s20, 3
      %p132 = por %p130, %p131
      %p133 = scmp.ne.s32.totalorder %s122, %s123
      %p134 = scmp.eq.s32.totalorder %s20, 0
      %p135 = por %p133, %p134
      %p136 = scmp.ne.s32.totalorder %s122, %s123
      %p137 = scmp.eq.s32.totalorder %s21, 3
      %p138 = por %p136, %p137
      %p140 = scmp.ne.s32.totalorder %s123, %s139
      %p141 = scmp.eq.s32.totalorder %s21, 0
      %p142 = por %p140, %p141
      %s143 = ssub.s32 %s23, %s30
      %s144 = ssub.s32 %s22, %s34
      %s145 = sor.u32 %s143, %s144
      %p146 = scmp.eq.s32.totalorder %s145, 0
      %s148 = sadd.s32 %s147, 1
      %s149 = scalar_select %p146, %s147, %s148
      %p152 = pneg %p146
      %p153 = scmp.eq.s32.totalorder %s15, 3
      %p154 = por %p152, %p153
      %p155 = scmp.ne.s32.totalorder %s147, %s150
      %p156 = scmp.eq.s32.totalorder %s15, 0
      %p157 = por %p155, %p156
      %p158 = scmp.ne.s32.totalorder %s147, %s150
      %p159 = scmp.eq.s32.totalorder %s20, 3
      %p160 = por %p158, %p159
      %p161 = scmp.ne.s32.totalorder %s150, %s151
      %p162 = scmp.eq.s32.totalorder %s20, 0
      %p163 = por %p161, %p162
      %p164 = scmp.ne.s32.totalorder %s150, %s151
      %p165 = scmp.eq.s32.totalorder %s21, 3
      %p166 = por %p164, %p165
      %p168 = scmp.ne.s32.totalorder %s151, %s167
      %p169 = scmp.eq.s32.totalorder %s21, 0
      %p170 = por %p168, %p169
      %s171 = ssub.s32 %s22, %s34
      %p172 = scmp.eq.s32.totalorder %s171, 0
      %s174 = sadd.s32 %s173, 1
      %s175 = scalar_select %p172, %s173, %s174
      %p178 = pneg %p172
      %p179 = scmp.eq.s32.totalorder %s15, 3
      %p180 = por %p178, %p179
      %p181 = scmp.ne.s32.totalorder %s173, %s176
      %p182 = scmp.eq.s32.totalorder %s15, 0
      %p183 = por %p181, %p182
      %p184 = scmp.ne.s32.totalorder %s173, %s176
      %p185 = scmp.eq.s32.totalorder %s20, 3
      %p186 = por %p184, %p185
      %p187 = scmp.ne.s32.totalorder %s176, %s177
      %p188 = scmp.eq.s32.totalorder %s20, 0
      %p189 = por %p187, %p188
      %p190 = scmp.ne.s32.totalorder %s176, %s177
      %p191 = scmp.eq.s32.totalorder %s21, 3
      %p192 = por %p190, %p191
      %p194 = scmp.ne.s32.totalorder %s177, %s193
      %p195 = scmp.eq.s32.totalorder %s21, 0
      %p196 = por %p194, %p195
      %s197 = ssub.s32 %s22, %s34
      %p198 = scmp.eq.s32.totalorder %s197, 0
      %s200 = sadd.s32 %s199, 1
      %s201 = scalar_select %p198, %s199, %s200
      %p204 = pneg %p198
      %p205 = scmp.eq.s32.totalorder %s15, 3
      %p206 = por %p204, %p205
      %p207 = scmp.ne.s32.totalorder %s199, %s202
      %p208 = scmp.eq.s32.totalorder %s15, 0
      %p209 = por %p207, %p208
      %p210 = scmp.ne.s32.totalorder %s199, %s202
      %p211 = scmp.eq.s32.totalorder %s20, 3
      %p212 = por %p210, %p211
      %p213 = scmp.ne.s32.totalorder %s202, %s203
      %p214 = scmp.eq.s32.totalorder %s20, 0
      %p215 = por %p213, %p214
      %p216 = scmp.ne.s32.totalorder %s202, %s203
      %p217 = scmp.eq.s32.totalorder %s21, 3
      %p218 = por %p216, %p217
      %p220 = scmp.ne.s32.totalorder %s203, %s219
      %p221 = scmp.eq.s32.totalorder %s21, 0
      %p222 = por %p220, %p221
      %p223 = scmp.le.s32.totalorder 1, %s15
      %p224 = scmp.lt.s32.totalorder %s15, 5
      %p225 = pnand %p223, %p224
      %p226 = pneg %p225
      // Predicated region
      $region9: #{_lambda_.4} parent=5 // pred_check
        _
      $region10: #{_lambda_.4} parent=5 // pred_check_branch
        %228 = sbr.rel (%p225) target = $region12
      $region11: #{_lambda_.4} parent=5 // pred_region
        %s229 = ssub.s32 %s15, 1
      $region12: #{_lambda_.4} parent=5 // pred_fallthru
        _
      %p230 = scmp.lt.s32.totalorder %s15, 4
      // Predicated region
      $region13: #{_lambda_.4} parent=5 // pred_check
        %p231 = pneg %p230
      $region14: #{_lambda_.4} parent=5 // pred_check_branch
        %233 = sbr.rel (%p231) target = $region16
      $region15: #{_lambda_.4} parent=5 // pred_region
        // Predicated region
        $region17: #{_lambda_.4} parent=15 // pred_check
          %p234 = pneg %p49
        $region18: #{_lambda_.4} parent=15 // pred_check_branch
          %236 = sbr.rel (%p234) target = $region20
        $region19: #{_lambda_.4} parent=15 // pred_region
          %p237 = scmp.lt.s32.totalorder %s23, 3
          %s238 = scalar_select %p237, %s23, 3
          %p239 = scmp.lt.s32.totalorder %s22, 0
          %s240 = scalar_select %p239, %s22, 0
          %s241 = smul.addr %s238, 2
          %s242 = sadd.s32 %s240, %s241
          %s243 = smul.addr %s242, 8
          %s244 = scalar_lea.vmem %s0, %s243
        $region20: #{_lambda_.4} parent=15 // pred_fallthru
          _
        // Predicated region
        $region21: #{_lambda_.4} parent=15 // pred_check
          %p245 = pneg %p77
        $region22: #{_lambda_.4} parent=15 // pred_check_branch
          %247 = sbr.rel (%p245) target = $region24
        $region23: #{_lambda_.4} parent=15 // pred_region
          %p248 = scmp.lt.s32.totalorder %s23, 3
          %s249 = scalar_select %p248, %s23, 3
          %p250 = scmp.lt.s32.totalorder %s22, 0
          %s251 = scalar_select %p250, %s22, 0
          %s252 = smul.addr %s249, 2
          %s253 = sadd.s32 %s251, %s252
          %s254 = smul.addr %s253, 8
          %s255 = scalar_lea.vmem %s1, %s254
        $region24: #{_lambda_.4} parent=15 // pred_fallthru
          _
        // Predicated region
        $region25: #{_lambda_.4} parent=15 // pred_check
          %p256 = pneg %p103
        $region26: #{_lambda_.4} parent=15 // pred_check_branch
          %258 = sbr.rel (%p256) target = $region28
        $region27: #{_lambda_.4} parent=15 // pred_region
          %p259 = scmp.lt.s32.totalorder %s23, 3
          %s260 = scalar_select %p259, %s23, 3
          %s261 = smul.addr %s260, 2
          %s262 = smul.addr %s261, 4
          %s263 = scalar_lea.vmem %s2, %s262
        $region28: #{_lambda_.4} parent=15 // pred_fallthru
          _
        // Predicated region
        $region29: #{_lambda_.4} parent=15 // pred_check
          %p264 = pneg %p129
        $region30: #{_lambda_.4} parent=15 // pred_check_branch
          %266 = sbr.rel (%p264) target = $region32
        $region31: #{_lambda_.4} parent=15 // pred_region
          %p267 = scmp.lt.s32.totalorder %s23, 3
          %s268 = scalar_select %p267, %s23, 3
          %s269 = smul.addr %s268, 2
          %s270 = smul.addr %s269, 4
          %s271 = scalar_lea.vmem %s3, %s270
        $region32: #{_lambda_.4} parent=15 // pred_fallthru
          _
      $region16: #{_lambda_.4} parent=5 // pred_fallthru
        _
      %p272 = scmp.le.s32.totalorder 1, %s15
      %p273 = scmp.lt.s32.totalorder %s15, 5
      %p274 = pnand %p272, %p273
      %p275 = pneg %p274
      // Predicated region
      $region33: #{_lambda_.4} parent=5 // pred_check
        _
      $region34: #{_lambda_.4} parent=5 // pred_check_branch
        %277 = sbr.rel (%p274) target = $region36
      $region35: #{_lambda_.4} parent=5 // pred_region
        %s278 = ssub.s32 %s15, 1
        %p279 = scmp.lt.s32.totalorder %s25, 3
        %s280 = scalar_select %p279, %s25, 3
        %p281 = scmp.lt.s32.totalorder %s24, 0
        %s282 = scalar_select %p281, %s24, 0
        %s283 = smul.addr %s280, 2
        %s284 = sadd.s32 %s282, %s283
        %s285 = smul.addr %s284, 8
        %s286 = scalar_lea.vmem %s0, %s285
        %p287 = pneg %p55
        %p288 = pneg %p52
        %p289 = scmp.lt.s32.totalorder %s25, 3
        %s290 = scalar_select %p289, %s25, 3
        %p291 = scmp.lt.s32.totalorder %s24, 0
        %s292 = scalar_select %p291, %s24, 0
        %s293 = smul.addr %s290, 2
        %s294 = sadd.s32 %s292, %s293
        %s295 = smul.addr %s294, 8
        %s296 = scalar_lea.vmem %s1, %s295
        %p297 = pneg %p83
        %p298 = pneg %p80
        %p299 = scmp.lt.s32.totalorder %s25, 3
        %s300 = scalar_select %p299, %s25, 3
        %s301 = smul.addr %s300, 2
        %s302 = smul.addr %s301, 4
        %s303 = scalar_lea.vmem %s2, %s302
        %p304 = pneg %p109
        %p305 = pneg %p106
        %p306 = scmp.lt.s32.totalorder %s25, 3
        %s307 = scalar_select %p306, %s25, 3
        %s308 = smul.addr %s307, 2
        %s309 = smul.addr %s308, 4
        %s310 = scalar_lea.vmem %s3, %s309
        %p311 = pneg %p135
        %p312 = pneg %p132
        %p313 = pneg %p163
        %p314 = pneg %p160
        %p315 = scmp.lt.s32.totalorder %s25, 3
        %s316 = scalar_select %p315, %s25, 3
        %p317 = scmp.lt.s32.totalorder %s24, 0
        %s318 = scalar_select %p317, %s24, 0
        %s319 = smul.addr %s316, 2
        %s320 = sadd.s32 %s318, %s319
        %s321 = smul.addr %s320, 4
        %s322 = scalar_lea.vmem %s4, %s321
        %p323 = pneg %p189
        %p324 = pneg %p186
        %p325 = pneg %p215
        %p326 = pneg %p212
        %p327 = scmp.lt.s32.totalorder %s25, 3
        %s328 = scalar_select %p327, %s25, 3
        %p329 = scmp.lt.s32.totalorder %s24, 0
        %s330 = scalar_select %p329, %s24, 0
        %s331 = smul.addr %s328, 2
        %s332 = sadd.s32 %s330, %s331
        %s333 = smul.addr %s332, 8
        %s334 = scalar_lea.vmem %s0, %s333
        %p335 = scmp.lt.s32.totalorder %s25, 3
        %s336 = scalar_select %p335, %s25, 3
        %p337 = scmp.lt.s32.totalorder %s24, 0
        %s338 = scalar_select %p337, %s24, 0
        %s339 = smul.addr %s336, 2
        %s340 = sadd.s32 %s338, %s339
        %s341 = smul.addr %s340, 8
        %s342 = scalar_lea.vmem %s1, %s341
        %p343 = scmp.lt.s32.totalorder %s25, 3
        %s344 = scalar_select %p343, %s25, 3
        %s345 = smul.addr %s344, 2
        %s346 = smul.addr %s345, 4
        %s347 = scalar_lea.vmem %s2, %s346
        %p348 = scmp.lt.s32.totalorder %s25, 3
        %s349 = scalar_select %p348, %s25, 3
        %s350 = smul.addr %s349, 2
        %s351 = smul.addr %s350, 4
        %s352 = scalar_lea.vmem %s3, %s351
        %p353 = scmp.lt.s32.totalorder %s25, 3
        %s354 = scalar_select %p353, %s25, 3
        %p355 = scmp.lt.s32.totalorder %s24, 0
        %s356 = scalar_select %p355, %s24, 0
        %s357 = smul.addr %s354, 2
        %s358 = sadd.s32 %s356, %s357
        %s359 = smul.addr %s358, 4
        %s360 = scalar_lea.vmem %s4, %s359
        %p362 = scmp.eq.s32.totalorder %s25, 0
        // Predicated region
        $region37: #{_lambda_.4} parent=35 // pred_check
          %p363 = pneg %p362
        $region38: #{_lambda_.4} parent=35 // pred_check_branch
          %365 = sbr.rel (%p363) target = $region40
        $region39: #{_lambda_.4} parent=35 // pred_region
          %vm366 = vcmask 64512
          %367 = vst.msk [vmem:[#allocation2] sm:$0xff] %vm366, 0.0
          %368 = vst.msk [vmem:[#allocation2 + $0x8] sm:$0xff] %vm366, 0.0
          %369 = vst.msk [vmem:[#allocation4] sm:$0xff] %vm366, 0.0
          %370 = vst.msk [vmem:[#allocation4 + $0x8] sm:$0xff] %vm366, 0.0
        $region40: #{_lambda_.4} parent=35 // pred_fallthru
          _
        %v371 = vld [vmem:[%s342] sm:$0xff]
        %v372 = vld [vmem:[%s342 + $0x8] sm:$0xff]
        %v373 = vmul.f32 %v371, %v371
        %v374 = vmul.f32 %v372, %v372
        %v375 = vrcp.pop %v373
        %v376 = vmul.f32 %v373, %v375
        %v377 = vsub.f32 1.0, %v376
        %v378 = vmul.f32 %v375, %v377
        %v379 = vadd.f32 %v375, %v378
        %vm380 = vweird.f32 %v373
        %vm381 = vweird.f32 %v375
        %vm382 = vmor %vm380, %vm381
        %v383 = vsel %vm382, %v375, %v379
        %v384 = vand.u32 2147483647, %v373
        %vm385 = vcmp.eq.f32.partialorder %v384, 8.507059e+37
        %v386 = vand.u32 %v373, 2147483648
        %v387 = vor.u32 1.1754944e-38, %v386
        %v388 = vsel %vm385, %v387, %v383
        %v389 = vmul.f32 -0.5, %v388
        %v390 = vrcp.pop %v374
        %v391 = vmul.f32 %v374, %v390
        %v392 = vsub.f32 1.0, %v391
        %v393 = vmul.f32 %v390, %v392
        %v394 = vadd.f32 %v390, %v393
        %vm395 = vweird.f32 %v374
        %vm396 = vweird.f32 %v390
        %vm397 = vmor %vm395, %vm396
        %v398 = vsel %vm397, %v390, %v394
        %v399 = vand.u32 2147483647, %v374
        %vm400 = vcmp.eq.f32.partialorder %v399, 8.507059e+37
        %v401 = vand.u32 %v374, 2147483648
        %v402 = vor.u32 1.1754944e-38, %v401
        %v403 = vsel %vm400, %v402, %v398
        %v404 = vmul.f32 -0.5, %v403
        %v405 = vlaneseq
        %v406 = vshrl.u32 %v405, 7
        %s407 = smul.u32 %s24, 8
        %v408 = vstv %s407
        %v409 = vadd.s32 %v406, %v408
        %v410 = vlaneseq
        %v411 = vand.u32 %v410, 127
        %v412 = vsub.s32 %v409, %v411
        %v413 = vcvt.s32.f32 %v412
        %v414 = vmul.f32 %v413, %v413
        %416 = vset.pattern.permute.xlu0 0
        %417 = vperm.xlu0 %416, %v389
        %v418 = vpop.permute.xlu0 %417
        %421 = vset.pattern.permute.xlu0 0
        %422 = vperm.xlu0 %421, %v404
        %v423 = vpop.permute.xlu0 %422
        %v425 = vmul.f32 %v414, %v418
        %v426 = vmul.f32 %v414, %v423
        %v427 = vmul.f32 %v425, 1.442695
        %v428 = vpow.pop %v427
        %v429 = vmul.f32 %v426, 1.442695
        %v430 = vpow.pop %v429
        %v431 = vld [vmem:[#allocation2] sm:$0xff]
        %v432 = vld [vmem:[#allocation2 + $0x8] sm:$0xff]
        %vm433 = vcmask 64512
        %v434 = vsel %vm433, %v428, 0.0
        %435 = vadd.xlane.f32.xlu0 %v434
        %v436 = vpop.xlane.xlu0 %435
        %v437 = vsel %vm433, %v430, 0.0
        %438 = vadd.xlane.f32.xlu0 %v437
        %v439 = vpop.xlane.xlu0 %438
        %v440 = vrcp.pop %v436
        %v441 = vmul.f32 %v436, %v440
        %v442 = vsub.f32 1.0, %v441
        %v443 = vmul.f32 %v440, %v442
        %v444 = vadd.f32 %v440, %v443
        %vm445 = vweird.f32 %v436
        %vm446 = vweird.f32 %v440
        %vm447 = vmor %vm445, %vm446
        %v448 = vsel %vm447, %v440, %v444
        %v449 = vand.u32 2147483647, %v436
        %vm450 = vcmp.eq.f32.partialorder %v449, 8.507059e+37
        %v451 = vand.u32 %v436, 2147483648
        %v452 = vor.u32 1.1754944e-38, %v451
        %v453 = vsel %vm450, %v452, %v448
        %v454 = vmul.f32 0.25, %v453
        %v455 = vrcp.pop %v439
        %v456 = vmul.f32 %v439, %v455
        %v457 = vsub.f32 1.0, %v456
        %v458 = vmul.f32 %v455, %v457
        %v459 = vadd.f32 %v455, %v458
        %vm460 = vweird.f32 %v439
        %vm461 = vweird.f32 %v455
        %vm462 = vmor %vm460, %vm461
        %v463 = vsel %vm462, %v455, %v459
        %v464 = vand.u32 2147483647, %v439
        %vm465 = vcmp.eq.f32.partialorder %v464, 8.507059e+37
        %v466 = vand.u32 %v439, 2147483648
        %v467 = vor.u32 1.1754944e-38, %v466
        %v468 = vsel %vm465, %v467, %v463
        %v469 = vmul.f32 0.25, %v468
        %v470 = vmul.f32 %v428, %v454
        %v471 = vmul.f32 %v430, %v469
        %v472 = vadd.f32 %v431, %v470
        %v473 = vadd.f32 %v432, %v471
        %474 = vst.msk [vmem:[#allocation2] sm:$0xff] %vm433, %v472
        %475 = vst.msk [vmem:[#allocation2 + $0x8] sm:$0xff] %vm433, %v473
        %v476 = vld [vmem:[%s334] sm:$0xff]
        %v477 = vld [vmem:[%s334 + $0x8] sm:$0xff]
        %v478 = vmul.f32 %v476, 0.35355338
        %v479 = vmul.f32 %v477, 0.35355338
        %v480 = vpack.c.bf16 %v478, %v478
        %v481 = vpack.c.bf16 %v479, %v479
        %v482 = vld [vmem:[%s347] sm:$0xf]
        %v483 = vld [vmem:[%s347 + $0x4] sm:$0xf]
        %v485 = vsel %vm433, %v480, 0
        %v488 = vsel %vm433, %v482, 0
        %490 = vmatpush.bf16.xpose.msra.mxu0 0
        %491 = vmatpush.bf16.xpose.msra.mxu0 0
        %492 = vmatpush.bf16.xpose.msra.mxu0 0
        %493 = vmatpush.bf16.xpose.msra.mxu0 0
        %494 = vmatpush.bf16.xpose.msra.mxu0 0
        %495 = vmatpush.bf16.xpose.msra.mxu0 0
        %496 = vmatpush.bf16.xpose.msra.mxu0 0
        %497 = vmatpush.bf16.xpose.msra.mxu0 %v488
        %498 = vmatmul.bf16.gmra.mxu0 %v485
        %v499 = vpop.f32.mrf.mxu0
        %v500 = vadd.f32 0.0, %v499
        %v501 = vpop.f32.mrf.mxu0
        %502 = vdwg.mxu0
        %v504 = vsel %vm433, %v481, 0
        %v507 = vsel %vm433, %v483, 0
        %509 = vmatpush.bf16.xpose.msra.mxu0 0
        %510 = vmatpush.bf16.xpose.msra.mxu0 0
        %511 = vmatpush.bf16.xpose.msra.mxu0 0
        %512 = vmatpush.bf16.xpose.msra.mxu0 0
        %513 = vmatpush.bf16.xpose.msra.mxu0 0
        %514 = vmatpush.bf16.xpose.msra.mxu0 0
        %515 = vmatpush.bf16.xpose.msra.mxu0 0
        %516 = vmatpush.bf16.xpose.msra.mxu0 %v507
        %517 = vmatmul.bf16.gmra.mxu0 %v504
        %v518 = vpop.f32.mrf.mxu0
        %v519 = vadd.f32 0.0, %v518
        %v520 = vpop.f32.mrf.mxu0
        %521 = vdwg.mxu0
        %v522 = vsel %vm433, %v500, -inf
        %v523 = vsel %vm433, %v519, -inf
        %v524 = vmax.f32 %v522, %v523
        %v525 = vsub.f32 %v500, %v524
        %v526 = vsub.f32 %v519, %v524
        %v527 = vmul.f32 %v525, 1.442695
        %v528 = vpow.pop %v527
        %v529 = vmul.f32 %v526, 1.442695
        %v530 = vpow.pop %v529
        %v531 = vsel %vm433, %v528, 0.0
        %v532 = vsel %vm433, %v530, 0.0
        %v533 = vadd.f32 %v531, %v532
        %v534 = vrcp.pop %v533
        %v535 = vmul.f32 %v533, %v534
        %v536 = vsub.f32 1.0, %v535
        %v537 = vmul.f32 %v534, %v536
        %v538 = vadd.f32 %v534, %v537
        %vm539 = vweird.f32 %v533
        %vm540 = vweird.f32 %v534
        %vm541 = vmor %vm539, %vm540
        %v542 = vsel %vm541, %v534, %v538
        %v543 = vand.u32 2147483647, %v533
        %vm544 = vcmp.eq.f32.partialorder %v543, 8.507059e+37
        %v545 = vand.u32 %v533, 2147483648
        %v546 = vor.u32 1.1754944e-38, %v545
        %v547 = vsel %vm544, %v546, %v542
        %v548 = vmul.f32 0.25, %v547
        %v549 = vmul.f32 %v528, %v548
        %v550 = vmul.f32 %v530, %v548
        %v551 = vld [vmem:[#allocation4] sm:$0xff]
        %v552 = vld [vmem:[#allocation4 + $0x8] sm:$0xff]
        %v553 = vadd.f32 %v551, %v549
        %v554 = vadd.f32 %v552, %v550
        %555 = vst.msk [vmem:[#allocation4] sm:$0xff] %vm433, %v553
        %556 = vst.msk [vmem:[#allocation4 + $0x8] sm:$0xff] %vm433, %v554
        %v557 = vpack.c.bf16 %v549, %v549
        %v558 = vpack.c.bf16 %v550, %v550
        %v559 = vld [vmem:[%s352] sm:$0xf]
        %v560 = vld [vmem:[%s352 + $0x4] sm:$0xf]
        %v562 = vsel %vm433, %v557, 0
        %vm564 = vcmask 1043456
        %v566 = vsel %vm564, %v559, 0
        %568 = vmatpush.bf16.msra.mxu0 0
        %569 = vmatpush.bf16.msra.mxu0 0
        %570 = vmatpush.bf16.msra.mxu0 0
        %571 = vmatpush.bf16.msra.mxu0 0
        %572 = vmatpush.bf16.msra.mxu0 0
        %573 = vmatpush.bf16.msra.mxu0 0
        %574 = vmatpush.bf16.msra.mxu0 0
        %575 = vmatpush.bf16.msra.mxu0 %v566
        %576 = vmatmul.bf16.gmra.mxu0 %v562
        %v577 = vpop.f32.mrf.mxu0
        %v578 = vadd.f32 0.0, %v577
        %v579 = vpop.f32.mrf.mxu0
        %580 = vdwg.mxu0
        %v582 = vsel %vm433, %v558, 0
        %v585 = vsel %vm564, %v560, 0
        %587 = vmatpush.bf16.msra.mxu0 0
        %588 = vmatpush.bf16.msra.mxu0 0
        %589 = vmatpush.bf16.msra.mxu0 0
        %590 = vmatpush.bf16.msra.mxu0 0
        %591 = vmatpush.bf16.msra.mxu0 0
        %592 = vmatpush.bf16.msra.mxu0 0
        %593 = vmatpush.bf16.msra.mxu0 0
        %594 = vmatpush.bf16.msra.mxu0 %v585
        %595 = vmatmul.bf16.gmra.mxu0 %v582
        %v596 = vpop.f32.mrf.mxu0
        %v597 = vadd.f32 0.0, %v596
        %v598 = vpop.f32.mrf.mxu0
        %599 = vdwg.mxu0
        %v600 = vmul.f32 %v578, 4.0
        %v601 = vmul.f32 %v597, 4.0
        %v602 = vpack.c.bf16 %v600, %v600
        %v603 = vpack.c.bf16 %v601, %v601
        %vm604 = vcmask 60416
        %605 = vst.msk [vmem:[%s360] sm:$0xf] %vm604, %v602
        %606 = vst.msk [vmem:[%s360 + $0x4] sm:$0xf] %vm604, %v603
        %p607 = scmp.lt.s32.totalorder %s25, 3
        %s608 = scalar_select %p607, %s25, 3
        %p609 = scmp.lt.s32.totalorder %s24, 0
        %s610 = scalar_select %p609, %s24, 0
        %s611 = smul.addr %s608, 2
        %s612 = sadd.s32 %s610, %s611
        %s613 = smul.addr %s612, 4
        %s614 = scalar_lea.vmem %s4, %s613
        // Predicated region
        $region41: #{_lambda_.4} parent=35 // pred_check
          %p615 = pneg %p160
        $region42: #{_lambda_.4} parent=35 // pred_check_branch
          %617 = sbr.rel (%p615) target = $region44
        $region43: #{_lambda_.4} parent=35 // pred_region
          _
        $region44: #{_lambda_.4} parent=35 // pred_fallthru
          _
        // Predicated region
        $region45: #{_lambda_.4} parent=35 // pred_check
          %p618 = pneg %p186
        $region46: #{_lambda_.4} parent=35 // pred_check_branch
          %620 = sbr.rel (%p618) target = $region48
        $region47: #{_lambda_.4} parent=35 // pred_region
          %622 = vsyncadd [#allocation3], 0
          %s623 = smul.addr %s24, 8
          %s624 = scalar_lea.hbm %s5, %s623
          %s625 = sshll.u32 [#allocation2], 4
          %s626 = int_to_ptr.vmem [resolvable:$true] %s625
          %s627 = sshll.u32 %s624, 4
          %s628 = int_to_ptr.hbm [resolvable:$true] %s627
          %633 = dma.vmem_to_hbm [thread:$0]  %s626, 256, %s628, [#allocation3], 128, 128, 8
        $region48: #{_lambda_.4} parent=35 // pred_fallthru
          _
        // Predicated region
        $region49: #{_lambda_.4} parent=35 // pred_check
          %p634 = pneg %p212
        $region50: #{_lambda_.4} parent=35 // pred_check_branch
          %636 = sbr.rel (%p634) target = $region52
        $region51: #{_lambda_.4} parent=35 // pred_region
          %638 = vsyncadd [#allocation5], 0
          %s639 = smul.addr %s24, 8
          %s640 = scalar_lea.hbm %s6, %s639
          %s641 = sshll.u32 [#allocation4], 4
          %s642 = int_to_ptr.vmem [resolvable:$true] %s641
          %s643 = sshll.u32 %s640, 4
          %s644 = int_to_ptr.hbm [resolvable:$true] %s643
          %649 = dma.vmem_to_hbm [thread:$0]  %s642, 256, %s644, [#allocation5], 128, 128, 8
        $region52: #{_lambda_.4} parent=35 // pred_fallthru
          _
        // Predicated region
        $region53: #{_lambda_.4} parent=35 // pred_check
          %p650 = pneg %p186
        $region54: #{_lambda_.4} parent=35 // pred_check_branch
          %652 = sbr.rel (%p650) target = $region56
        $region55: #{_lambda_.4} parent=35 // pred_region
          %654 = dma.done [#allocation3], 256
        $region56: #{_lambda_.4} parent=35 // pred_fallthru
          _
        // Predicated region
        $region57: #{_lambda_.4} parent=35 // pred_check
          %p655 = pneg %p212
        $region58: #{_lambda_.4} parent=35 // pred_check_branch
          %657 = sbr.rel (%p655) target = $region60
        $region59: #{_lambda_.4} parent=35 // pred_region
          %659 = dma.done [#allocation5], 256
        $region60: #{_lambda_.4} parent=35 // pred_fallthru
          _
      $region36: #{_lambda_.4} parent=5 // pred_fallthru
        _
      %p660 = scmp.le.s32.totalorder 2, %s15
      // Predicated region
      $region61: #{_lambda_.4} parent=5 // pred_check
        %p661 = pneg %p660
      $region62: #{_lambda_.4} parent=5 // pred_check_branch
        %663 = sbr.rel (%p661) target = $region64
      $region63: #{_lambda_.4} parent=5 // pred_region
        %s664 = ssub.s32 %s15, 2
        // Predicated region
        $region65: #{_lambda_.4} parent=63 // pred_check
          %p665 = pneg %p166
        $region66: #{_lambda_.4} parent=63 // pred_check_branch
          %667 = sbr.rel (%p665) target = $region68
        $region67: #{_lambda_.4} parent=63 // pred_region
          %p668 = scmp.lt.s32.totalorder %s27, 3
          %s669 = scalar_select %p668, %s27, 3
          %p670 = scmp.lt.s32.totalorder %s26, 0
          %s671 = scalar_select %p670, %s26, 0
          %s672 = smul.addr %s669, 2
          %s673 = sadd.s32 %s671, %s672
          %s674 = smul.addr %s673, 4
          %s675 = scalar_lea.vmem %s4, %s674
        $region68: #{_lambda_.4} parent=63 // pred_fallthru
          _
      $region64: #{_lambda_.4} parent=5 // pred_fallthru
        _
    $region6: #{_lambda_.4} parent=1 // loop_footer
      %s19 = sadd.s32 1, %s15
    $region7: #{_lambda_.4} parent=1 // loop_footer_branch
      %14 = sbr.rel target = $region3
    $region8: #{_lambda_.4} parent=1 // loop_exit
      _
    %676 = vsyncpa [#allocation3], 1
    %s677 = scalar_lea.sflag [#allocation3], 1
    %678 = vsyncpa %s677, 1
    %679 = vsyncpa [#allocation5], 1

// kernel: _lambda_.7
$region0: #{_lambda_.7}
  #allocation0 [shape = 'u32[]', space=smem, size = 0x4, offset = 0x4, fixed_abs, tag = 'smem constant byte address 0x4 - core index']
  #allocation1 [shape = 'u32[72,128]{1,0:T(1,128)}', space=vmem, size = 0x9000, scoped, tag = 'internal scratch']
  %s0 = inlined_call_operand.vmem [shape: f32[16,32], index: 0, kind: input, shape index: {}]
  %s1 = inlined_call_operand.vmem [shape: bf16[4,16,8], index: 1, kind: input, shape index: {}]
  %s2 = inlined_call_operand.vmem [shape: bf16[32,128], index: 2, kind: input, shape index: {}]
  %s3 = inlined_call_operand.vmem [shape: f32[1,128], index: 3, kind: input, shape index: {}]
  %s4 = inlined_call_operand.vmem [shape: bf16[128,32], index: 4, kind: input, shape index: {}]
  %s5 = inlined_call_operand.vmem [shape: f32[1,32], index: 5, kind: input, shape index: {}]
  %s6 = inlined_call_operand.vmem [shape: f32[1,32], index: 6, kind: input, shape index: {}]
  %s7 = inlined_call_operand.vmem [shape: f32[1,32], index: 7, kind: input, shape index: {}]
  %s8 = inlined_call_operand.vmem [shape: f32[1,32], index: 8, kind: input, shape index: {}]
  %s9 = inlined_call_operand.vmem [shape: f32[1,32], index: 9, kind: input, shape index: {}]
  %s10 = inlined_call_operand.hbm [shape: f32[16,32], index: 10, kind: output, shape index: {}]
  %s11 = sld [smem:[#allocation0]]
  $region50: #{_lambda_.7} parent=0
    _
  %s13 = ssub.s32 1, %s11
  %s14 = scalar_select 0, %s13, %s11
  $region1: #{_lambda_.7} parent=0
    #allocation2 [shape = 'u8[8192]{0}', space=vmem, size = 0x2000, scoped, tag = 'output window, operand 0, single buffered']
    #allocation3 [shape = 's32[1]{0}', space=sflag, size = 0x4, scoped, tag = 'scoped memory for _lambda_.7']
    %15 = vsyncpa [#allocation3], 0
    // Predicated region
    $region2: #{_lambda_.7} parent=1 // pred_check
      _
    $region3: #{_lambda_.7} parent=1 // pred_check_branch
      %17 = sbr.rel (0) target = $region5
    $region4: #{_lambda_.7} parent=1 // pred_region
      _
    $region5: #{_lambda_.7} parent=1 // pred_fallthru
      _
    // Predicated region
    $region6: #{_lambda_.7} parent=1 // pred_check
      _
    $region7: #{_lambda_.7} parent=1 // pred_check_branch
      %19 = sbr.rel (0) target = $region9
    $region8: #{_lambda_.7} parent=1 // pred_region
      _
    $region9: #{_lambda_.7} parent=1 // pred_fallthru
      _
    // Predicated region
    $region10: #{_lambda_.7} parent=1 // pred_check
      _
    $region11: #{_lambda_.7} parent=1 // pred_check_branch
      %21 = sbr.rel (0) target = $region13
    $region12: #{_lambda_.7} parent=1 // pred_region
      _
    $region13: #{_lambda_.7} parent=1 // pred_fallthru
      _
    // Predicated region
    $region14: #{_lambda_.7} parent=1 // pred_check
      _
    $region15: #{_lambda_.7} parent=1 // pred_check_branch
      %23 = sbr.rel (0) target = $region17
    $region16: #{_lambda_.7} parent=1 // pred_region
      _
    $region17: #{_lambda_.7} parent=1 // pred_fallthru
      _
    // Predicated region
    $region18: #{_lambda_.7} parent=1 // pred_check
      _
    $region19: #{_lambda_.7} parent=1 // pred_check_branch
      %25 = sbr.rel (0) target = $region21
    $region20: #{_lambda_.7} parent=1 // pred_region
      _
    $region21: #{_lambda_.7} parent=1 // pred_fallthru
      _
    // Predicated region
    $region22: #{_lambda_.7} parent=1 // pred_check
      _
    $region23: #{_lambda_.7} parent=1 // pred_check_branch
      %27 = sbr.rel (0) target = $region25
    $region24: #{_lambda_.7} parent=1 // pred_region
      _
    $region25: #{_lambda_.7} parent=1 // pred_fallthru
      _
    // Predicated region
    $region26: #{_lambda_.7} parent=1 // pred_check
      _
    $region27: #{_lambda_.7} parent=1 // pred_check_branch
      %29 = sbr.rel (0) target = $region29
    $region28: #{_lambda_.7} parent=1 // pred_region
      _
    $region29: #{_lambda_.7} parent=1 // pred_fallthru
      _
    // Predicated region
    $region30: #{_lambda_.7} parent=1 // pred_check
      _
    $region31: #{_lambda_.7} parent=1 // pred_check_branch
      %31 = sbr.rel (0) target = $region33
    $region32: #{_lambda_.7} parent=1 // pred_region
      _
    $region33: #{_lambda_.7} parent=1 // pred_fallthru
      _
    // Predicated region
    $region34: #{_lambda_.7} parent=1 // pred_check
      _
    $region35: #{_lambda_.7} parent=1 // pred_check_branch
      %33 = sbr.rel (0) target = $region37
    $region36: #{_lambda_.7} parent=1 // pred_region
      _
    $region37: #{_lambda_.7} parent=1 // pred_fallthru
      _
    // Predicated region
    $region38: #{_lambda_.7} parent=1 // pred_check
      _
    $region39: #{_lambda_.7} parent=1 // pred_check_branch
      %35 = sbr.rel (0) target = $region41
    $region40: #{_lambda_.7} parent=1 // pred_region
      _
    $region41: #{_lambda_.7} parent=1 // pred_fallthru
      _
    %v37 = vld [vmem:[%s0] sm:$0xff]
    %v38 = vld [vmem:[%s0 + $0x8] sm:$0xff]
    %v39 = vld [vmem:[%s1] sm:$0xf]
    %v40 = vld [vmem:[%s1 + $0x4] sm:$0xf]
    %s41 = scalar_lea.vmem %s1, 8
    %v42 = vld [vmem:[%s41] sm:$0xf]
    %v43 = vld [vmem:[%s41 + $0x4] sm:$0xf]
    %s44 = scalar_lea.vmem %s1, 16
    %v45 = vld [vmem:[%s44] sm:$0xf]
    %v46 = vld [vmem:[%s44 + $0x4] sm:$0xf]
    %s47 = scalar_lea.vmem %s1, 24
    %v48 = vld [vmem:[%s47] sm:$0xf]
    %v49 = vld [vmem:[%s47 + $0x4] sm:$0xf]
    %v52 = vunpack.c.l.b16 %v39
    %v53 = vunpack.c.l.b16 %v40
    %v54 = vpack.c.b16 %v53, %v52
    %v57 = vunpack.c.l.b16 %v42
    %v58 = vunpack.c.l.b16 %v43
    %v59 = vpack.c.b16 %v58, %v57
    %60 = vrot.lane.b32.xlu0 %v59, 8
    %v61 = vpop.permute.xlu0 %60
    %v64 = vunpack.c.l.b16 %v45
    %v65 = vunpack.c.l.b16 %v46
    %v66 = vpack.c.b16 %v65, %v64
    %67 = vrot.lane.b32.xlu0 %v66, 16
    %v68 = vpop.permute.xlu0 %67
    %v71 = vunpack.c.l.b16 %v48
    %v72 = vunpack.c.l.b16 %v49
    %v73 = vpack.c.b16 %v72, %v71
    %74 = vrot.lane.b32.xlu0 %v73, 24
    %v75 = vpop.permute.xlu0 %74
    %vm76 = vcmask 64512
    %v79 = vsel %vm76, %v54, %v61
    %vm80 = vcmask 130048
    %v82 = vsel %vm80, %v79, %v68
    %vm83 = vcmask 195584
    %v85 = vsel %vm83, %v82, %v75
    %v87 = vunpack.c.l.bf16 %v85
    %v88 = vunpack.c.h.bf16 %v85
    %v89 = vadd.f32 %v37, %v87
    %v90 = vadd.f32 %v38, %v88
    %v91 = vld [vmem:[%s6] sm:$0x1]
    %v92 = vld [vmem:[%s7] sm:$0x1]
    %vm93 = vcmask 261120
    %v94 = vsel %vm93, %v89, 0.0
    %95 = vadd.xlane.f32.xlu0 %v94
    %v96 = vpop.xlane.xlu0 %95
    %v97 = vsel %vm93, %v90, 0.0
    %98 = vadd.xlane.f32.xlu0 %v97
    %v99 = vpop.xlane.xlu0 %98
    %v100 = vrcp.pop 32.0
    %v101 = vmul.f32 32.0, %v100
    %v102 = vsub.f32 1.0, %v101
    %v103 = vmul.f32 %v100, %v102
    %v104 = vadd.f32 %v100, %v103
    %vm105 = vweird.f32 %v100
    %v106 = vsel %vm105, %v100, %v104
    %v107 = vmul.f32 %v96, %v106
    %v108 = vmul.f32 %v99, %v106
    %v109 = vsub.f32 %v89, %v107
    %v110 = vsub.f32 %v90, %v108
    %v111 = vmul.f32 %v109, %v109
    %v112 = vmul.f32 %v110, %v110
    %v113 = vsel %vm93, %v111, 0.0
    %114 = vadd.xlane.f32.xlu0 %v113
    %v115 = vpop.xlane.xlu0 %114
    %v116 = vsel %vm93, %v112, 0.0
    %117 = vadd.xlane.f32.xlu0 %v116
    %v118 = vpop.xlane.xlu0 %117
    %v119 = vmul.f32 %v115, %v106
    %v120 = vmul.f32 %v118, %v106
    %v121 = vadd.f32 %v119, 1e-05
    %v122 = vadd.f32 %v120, 1e-05
    %v123 = vrsqrt.pop %v121
    %v124 = vmul.f32 %v123, %v121
    %v125 = vmul.f32 %v124, %v123
    %v126 = vmul.f32 0.5, %v125
    %v127 = vsub.f32 1.5, %v126
    %v128 = vmul.f32 %v123, %v127
    %vm129 = vweird.f32 %v121
    %vm130 = vweird.f32 %v123
    %vm131 = vmor %vm129, %vm130
    %v132 = vsel %vm131, %v123, %v128
    %v133 = vrsqrt.pop %v122
    %v134 = vmul.f32 %v133, %v122
    %v135 = vmul.f32 %v134, %v133
    %v136 = vmul.f32 0.5, %v135
    %v137 = vsub.f32 1.5, %v136
    %v138 = vmul.f32 %v133, %v137
    %vm139 = vweird.f32 %v122
    %vm140 = vweird.f32 %v133
    %vm141 = vmor %vm139, %vm140
    %v142 = vsel %vm141, %v133, %v138
    %v143 = vmul.f32 %v109, %v132
    %v144 = vmul.f32 %v110, %v142
    %v146 = vperm.slane %v91, 0
    %v148 = vmul.f32 %v143, %v146
    %v149 = vmul.f32 %v144, %v146
    %v151 = vperm.slane %v92, 0
    %v153 = vadd.f32 %v148, %v151
    %v154 = vadd.f32 %v149, %v151
    %v155 = vpack.c.bf16 %v154, %v153
    %v156 = vld [vmem:[%s2] sm:$0xf]
    %v157 = vld [vmem:[%s2 + $0x4] sm:$0xf]
    %v158 = vld [vmem:[%s2 + $0x8] sm:$0xf]
    %v159 = vld [vmem:[%s2 + $0xc] sm:$0xf]
    %v160 = vld [vmem:[%s3] sm:$0x1]
    %v162 = vperm.slane %v160, 0
    %v168 = vunpack.c.l.b16 %v156
    %v169 = vunpack.c.l.b16 %v157
    %v170 = vunpack.c.l.b16 %v158
    %v171 = vunpack.c.l.b16 %v159
    %v172 = vpack.c.b16 %v169, %v168
    %v173 = vpack.c.b16 %v171, %v170
    %v177 = vsel %vm93, %v155, 0
    %179 = vmatpush.bf16.msra.mxu0 0
    %180 = vmatpush.bf16.msra.mxu0 0
    %181 = vmatpush.bf16.msra.mxu0 0
    %182 = vmatpush.bf16.msra.mxu0 0
    %183 = vmatpush.bf16.msra.mxu0 0
    %184 = vmatpush.bf16.msra.mxu0 0
    %185 = vmatpush.bf16.msra.mxu0 %v173
    %186 = vmatpush.bf16.msra.mxu0 %v172
    %187 = vmatmul.bf16.gmra.mxu0 %v177
    %v188 = vpop.f32.mrf.mxu0
    %v189 = vadd.f32 %v162, %v188
    %v190 = vpop.f32.mrf.mxu0
    %v191 = vadd.f32 %v162, %v190
    %192 = vdwg.mxu0
    %v193 = vmul.f32 %v189, 0.5
    %v194 = vmul.f32 %v191, 0.5
    %v195 = vmul.f32 %v189, 0.70710677
    %v196 = vmul.f32 %v191, 0.70710677
    %v197 = vand.u32 2147483647, %v195
    %v198 = vand.u32 2147483647, %v196
    %v199 = vmul.f32 %v197, 0.3275911
    %v200 = vmul.f32 %v198, 0.3275911
    %v201 = vadd.f32 %v199, 1.0
    %v202 = vadd.f32 %v200, 1.0
    %v203 = vrcp.pop %v201
    %v204 = vmul.f32 %v201, %v203
    %v205 = vsub.f32 1.0, %v204
    %v206 = vmul.f32 %v203, %v205
    %v207 = vadd.f32 %v203, %v206
    %vm208 = vweird.f32 %v201
    %vm209 = vweird.f32 %v203
    %vm210 = vmor %vm208, %vm209
    %v211 = vsel %vm210, %v203, %v207
    %v212 = vand.u32 2147483647, %v201
    %vm213 = vcmp.eq.f32.partialorder %v212, 8.507059e+37
    %v214 = vand.u32 %v201, 2147483648
    %v215 = vor.u32 1.1754944e-38, %v214
    %v216 = vsel %vm213, %v215, %v211
    %v217 = vmul.f32 1.0, %v216
    %v218 = vrcp.pop %v202
    %v219 = vmul.f32 %v202, %v218
    %v220 = vsub.f32 1.0, %v219
    %v221 = vmul.f32 %v218, %v220
    %v222 = vadd.f32 %v218, %v221
    %vm223 = vweird.f32 %v202
    %vm224 = vweird.f32 %v218
    %vm225 = vmor %vm223, %vm224
    %v226 = vsel %vm225, %v218, %v222
    %v227 = vand.u32 2147483647, %v202
    %vm228 = vcmp.eq.f32.partialorder %v227, 8.507059e+37
    %v229 = vand.u32 %v202, 2147483648
    %v230 = vor.u32 1.1754944e-38, %v229
    %v231 = vsel %vm228, %v230, %v226
    %v232 = vmul.f32 1.0, %v231
    %v233 = vmul.f32 %v217, 1.0614054
    %v234 = vmul.f32 %v232, 1.0614054
    %v235 = vadd.f32 %v233, -1.4531521
    %v236 = vadd.f32 %v234, -1.4531521
    %v237 = vmul.f32 %v235, %v217
    %v238 = vmul.f32 %v236, %v232
    %v239 = vadd.f32 %v237, 1.4214138
    %v240 = vadd.f32 %v238, 1.4214138
    %v241 = vmul.f32 %v239, %v217
    %v242 = vmul.f32 %v240, %v232
    %v243 = vadd.f32 %v241, -0.28449672
    %v244 = vadd.f32 %v242, -0.28449672
    %v245 = vmul.f32 %v243, %v217
    %v246 = vmul.f32 %v244, %v232
    %v247 = vadd.f32 %v245, 0.2548296
    %v248 = vadd.f32 %v246, 0.2548296
    %v249 = vmul.f32 %v247, %v217
    %v250 = vmul.f32 %v248, %v232
    %v251 = vsub.f32 0.0, %v197
    %v252 = vsub.f32 0.0, %v198
    %v253 = vmul.f32 %v251, %v197
    %v254 = vmul.f32 %v252, %v198
    %v255 = vmul.f32 %v253, 1.442695
    %v256 = vpow.pop %v255
    %v257 = vmul.f32 %v254, 1.442695
    %v258 = vpow.pop %v257
    %v259 = vmul.f32 %v249, %v256
    %v260 = vmul.f32 %v250, %v258
    %v261 = vsub.f32 1.0, %v259
    %v262 = vsub.f32 1.0, %v260
    %vm263 = vcmp.ge.f32.partialorder %v195, 0.0
    %vm264 = vcmp.ge.f32.partialorder %v196, 0.0
    %v265 = vsub.f32 0.0, %v261
    %v266 = vsub.f32 0.0, %v262
    %v267 = vsel %vm263, %v261, %v265
    %v268 = vsel %vm264, %v262, %v266
    %v269 = vadd.f32 %v267, 1.0
    %v270 = vadd.f32 %v268, 1.0
    %v271 = vmul.f32 %v193, %v269
    %v272 = vmul.f32 %v194, %v270
    %v273 = vpack.c.bf16 %v272, %v271
    %v274 = vld [vmem:[%s4] sm:$0xf]
    %v275 = vld [vmem:[%s4 + $0x4] sm:$0xf]
    %v276 = vld [vmem:[%s4 + $0x8] sm:$0xf]
    %v277 = vld [vmem:[%s4 + $0xc] sm:$0xf]
    %v278 = vld [vmem:[%s4 + $0x10] sm:$0xf]
    %v279 = vld [vmem:[%s4 + $0x14] sm:$0xf]
    %v280 = vld [vmem:[%s4 + $0x18] sm:$0xf]
    %v281 = vld [vmem:[%s4 + $0x1c] sm:$0xf]
    %v282 = vld [vmem:[%s4 + $0x20] sm:$0xf]
    %v283 = vld [vmem:[%s4 + $0x24] sm:$0xf]
    %v284 = vld [vmem:[%s4 + $0x28] sm:$0xf]
    %v285 = vld [vmem:[%s4 + $0x2c] sm:$0xf]
    %v286 = vld [vmem:[%s4 + $0x30] sm:$0xf]
    %v287 = vld [vmem:[%s4 + $0x34] sm:$0xf]
    %v288 = vld [vmem:[%s4 + $0x38] sm:$0xf]
    %v289 = vld [vmem:[%s4 + $0x3c] sm:$0xf]
    %v290 = vld [vmem:[%s5] sm:$0x1]
    %v292 = vperm.slane %v290, 0
    %v310 = vunpack.c.l.b16 %v274
    %v311 = vunpack.c.l.b16 %v275
    %v312 = vunpack.c.l.b16 %v276
    %v313 = vunpack.c.l.b16 %v277
    %v314 = vunpack.c.l.b16 %v278
    %v315 = vunpack.c.l.b16 %v279
    %v316 = vunpack.c.l.b16 %v280
    %v317 = vunpack.c.l.b16 %v281
    %v318 = vunpack.c.l.b16 %v282
    %v319 = vunpack.c.l.b16 %v283
    %v320 = vunpack.c.l.b16 %v284
    %v321 = vunpack.c.l.b16 %v285
    %v322 = vunpack.c.l.b16 %v286
    %v323 = vunpack.c.l.b16 %v287
    %v324 = vunpack.c.l.b16 %v288
    %v325 = vunpack.c.l.b16 %v289
    %v326 = vpack.c.b16 %v311, %v310
    %v327 = vpack.c.b16 %v313, %v312
    %v328 = vpack.c.b16 %v315, %v314
    %v329 = vpack.c.b16 %v317, %v316
    %v330 = vpack.c.b16 %v319, %v318
    %v331 = vpack.c.b16 %v321, %v320
    %v332 = vpack.c.b16 %v323, %v322
    %v333 = vpack.c.b16 %v325, %v324
    %342 = vmatpush.bf16.msra.mxu0 %v333
    %343 = vmatpush.bf16.msra.mxu0 %v332
    %344 = vmatpush.bf16.msra.mxu0 %v331
    %345 = vmatpush.bf16.msra.mxu0 %v330
    %346 = vmatpush.bf16.msra.mxu0 %v329
    %347 = vmatpush.bf16.msra.mxu0 %v328
    %348 = vmatpush.bf16.msra.mxu0 %v327
    %349 = vmatpush.bf16.msra.mxu0 %v326
    %350 = vmatmul.bf16.gmra.mxu0 %v273
    %v351 = vpop.f32.mrf.mxu0
    %v352 = vadd.f32 %v292, %v351
    %v353 = vpop.f32.mrf.mxu0
    %v354 = vadd.f32 %v292, %v353
    %355 = vdwg.mxu0
    %v356 = vadd.f32 %v153, %v352
    %v357 = vadd.f32 %v154, %v354
    %v358 = vld [vmem:[%s8] sm:$0x1]
    %v359 = vld [vmem:[%s9] sm:$0x1]
    %v360 = vsel %vm93, %v356, 0.0
    %361 = vadd.xlane.f32.xlu0 %v360
    %v362 = vpop.xlane.xlu0 %361
    %v363 = vsel %vm93, %v357, 0.0
    %364 = vadd.xlane.f32.xlu0 %v363
    %v365 = vpop.xlane.xlu0 %364
    %v366 = vmul.f32 %v362, %v106
    %v367 = vmul.f32 %v365, %v106
    %v368 = vsub.f32 %v356, %v366
    %v369 = vsub.f32 %v357, %v367
    %v370 = vmul.f32 %v368, %v368
    %v371 = vmul.f32 %v369, %v369
    %v372 = vsel %vm93, %v370, 0.0
    %373 = vadd.xlane.f32.xlu0 %v372
    %v374 = vpop.xlane.xlu0 %373
    %v375 = vsel %vm93, %v371, 0.0
    %376 = vadd.xlane.f32.xlu0 %v375
    %v377 = vpop.xlane.xlu0 %376
    %v378 = vmul.f32 %v374, %v106
    %v379 = vmul.f32 %v377, %v106
    %v380 = vadd.f32 %v378, 1e-05
    %v381 = vadd.f32 %v379, 1e-05
    %v382 = vrsqrt.pop %v380
    %v383 = vmul.f32 %v382, %v380
    %v384 = vmul.f32 %v383, %v382
    %v385 = vmul.f32 0.5, %v384
    %v386 = vsub.f32 1.5, %v385
    %v387 = vmul.f32 %v382, %v386
    %vm388 = vweird.f32 %v380
    %vm389 = vweird.f32 %v382
    %vm390 = vmor %vm388, %vm389
    %v391 = vsel %vm390, %v382, %v387
    %v392 = vrsqrt.pop %v381
    %v393 = vmul.f32 %v392, %v381
    %v394 = vmul.f32 %v393, %v392
    %v395 = vmul.f32 0.5, %v394
    %v396 = vsub.f32 1.5, %v395
    %v397 = vmul.f32 %v392, %v396
    %vm398 = vweird.f32 %v381
    %vm399 = vweird.f32 %v392
    %vm400 = vmor %vm398, %vm399
    %v401 = vsel %vm400, %v392, %v397
    %v402 = vmul.f32 %v368, %v391
    %v403 = vmul.f32 %v369, %v401
    %v405 = vperm.slane %v358, 0
    %v407 = vmul.f32 %v402, %v405
    %v408 = vmul.f32 %v403, %v405
    %v410 = vperm.slane %v359, 0
    %v412 = vadd.f32 %v407, %v410
    %v413 = vadd.f32 %v408, %v410
    %414 = vst.msk [vmem:[#allocation2] sm:$0xff] %vm93, %v412
    %415 = vst.msk [vmem:[#allocation2 + $0x8] sm:$0xff] %vm93, %v413
    // Predicated region
    $region42: #{_lambda_.7} parent=1 // pred_check
      _
    $region43: #{_lambda_.7} parent=1 // pred_check_branch
      %417 = sbr.rel (0) target = $region45
    $region44: #{_lambda_.7} parent=1 // pred_region
      %419 = vsyncadd [#allocation3], 0
      %s420 = sshll.u32 [#allocation2], 4
      %s421 = int_to_ptr.vmem [resolvable:$true] %s420
      %s422 = sshll.u32 %s10, 4
      %s423 = int_to_ptr.hbm [resolvable:$true] %s422
      %428 = dma.vmem_to_hbm [thread:$0]  %s421, 256, %s423, [#allocation3], 128, 128, 8
    $region45: #{_lambda_.7} parent=1 // pred_fallthru
      _
    // Predicated region
    $region46: #{_lambda_.7} parent=1 // pred_check
      _
    $region47: #{_lambda_.7} parent=1 // pred_check_branch
      %430 = sbr.rel (0) target = $region49
    $region48: #{_lambda_.7} parent=1 // pred_region
      %432 = dma.done [#allocation3], 256
    $region49: #{_lambda_.7} parent=1 // pred_fallthru
      _
    %433 = vsyncpa [#allocation3], 1

// kernel: _lambda_.5
$region0: #{_lambda_.5}
  #allocation0 [shape = 'u32[]', space=smem, size = 0x4, offset = 0x4, fixed_abs, tag = 'smem constant byte address 0x4 - core index']
  #allocation1 [shape = 'u32[72,128]{1,0:T(1,128)}', space=vmem, size = 0x9000, scoped, tag = 'internal scratch']
  %s0 = inlined_call_operand.vmem [shape: f32[16,32], index: 0, kind: input, shape index: {}]
  %s1 = inlined_call_operand.vmem [shape: bf16[4,16,8], index: 1, kind: input, shape index: {}]
  %s2 = inlined_call_operand.vmem [shape: bf16[32,128], index: 2, kind: input, shape index: {}]
  %s3 = inlined_call_operand.vmem [shape: f32[1,128], index: 3, kind: input, shape index: {}]
  %s4 = inlined_call_operand.vmem [shape: bf16[128,32], index: 4, kind: input, shape index: {}]
  %s5 = inlined_call_operand.vmem [shape: f32[1,32], index: 5, kind: input, shape index: {}]
  %s6 = inlined_call_operand.vmem [shape: f32[1,32], index: 6, kind: input, shape index: {}]
  %s7 = inlined_call_operand.vmem [shape: f32[1,32], index: 7, kind: input, shape index: {}]
  %s8 = inlined_call_operand.vmem [shape: f32[1,32], index: 8, kind: input, shape index: {}]
  %s9 = inlined_call_operand.vmem [shape: f32[1,32], index: 9, kind: input, shape index: {}]
  %s10 = inlined_call_operand.vmem [shape: f32[16,32], index: 10, kind: output, shape index: {}]
  %s11 = sld [smem:[#allocation0]]
  $region50: #{_lambda_.5} parent=0
    _
  %s13 = ssub.s32 1, %s11
  %s14 = scalar_select 0, %s13, %s11
  // Predicated region
  $region2: #{_lambda_.5} parent=0 // pred_check
    _
  $region3: #{_lambda_.5} parent=0 // pred_check_branch
    %16 = sbr.rel (0) target = $region5
  $region4: #{_lambda_.5} parent=0 // pred_region
    _
  $region5: #{_lambda_.5} parent=0 // pred_fallthru
    _
  // Predicated region
  $region6: #{_lambda_.5} parent=0 // pred_check
    _
  $region7: #{_lambda_.5} parent=0 // pred_check_branch
    %18 = sbr.rel (0) target = $region9
  $region8: #{_lambda_.5} parent=0 // pred_region
    _
  $region9: #{_lambda_.5} parent=0 // pred_fallthru
    _
  // Predicated region
  $region10: #{_lambda_.5} parent=0 // pred_check
    _
  $region11: #{_lambda_.5} parent=0 // pred_check_branch
    %20 = sbr.rel (0) target = $region13
  $region12: #{_lambda_.5} parent=0 // pred_region
    _
  $region13: #{_lambda_.5} parent=0 // pred_fallthru
    _
  // Predicated region
  $region14: #{_lambda_.5} parent=0 // pred_check
    _
  $region15: #{_lambda_.5} parent=0 // pred_check_branch
    %22 = sbr.rel (0) target = $region17
  $region16: #{_lambda_.5} parent=0 // pred_region
    _
  $region17: #{_lambda_.5} parent=0 // pred_fallthru
    _
  // Predicated region
  $region18: #{_lambda_.5} parent=0 // pred_check
    _
  $region19: #{_lambda_.5} parent=0 // pred_check_branch
    %24 = sbr.rel (0) target = $region21
  $region20: #{_lambda_.5} parent=0 // pred_region
    _
  $region21: #{_lambda_.5} parent=0 // pred_fallthru
    _
  // Predicated region
  $region22: #{_lambda_.5} parent=0 // pred_check
    _
  $region23: #{_lambda_.5} parent=0 // pred_check_branch
    %26 = sbr.rel (0) target = $region25
  $region24: #{_lambda_.5} parent=0 // pred_region
    _
  $region25: #{_lambda_.5} parent=0 // pred_fallthru
    _
  // Predicated region
  $region26: #{_lambda_.5} parent=0 // pred_check
    _
  $region27: #{_lambda_.5} parent=0 // pred_check_branch
    %28 = sbr.rel (0) target = $region29
  $region28: #{_lambda_.5} parent=0 // pred_region
    _
  $region29: #{_lambda_.5} parent=0 // pred_fallthru
    _
  // Predicated region
  $region30: #{_lambda_.5} parent=0 // pred_check
    _
  $region31: #{_lambda_.5} parent=0 // pred_check_branch
    %30 = sbr.rel (0) target = $region33
  $region32: #{_lambda_.5} parent=0 // pred_region
    _
  $region33: #{_lambda_.5} parent=0 // pred_fallthru
    _
  // Predicated region
  $region34: #{_lambda_.5} parent=0 // pred_check
    _
  $region35: #{_lambda_.5} parent=0 // pred_check_branch
    %32 = sbr.rel (0) target = $region37
  $region36: #{_lambda_.5} parent=0 // pred_region
    _
  $region37: #{_lambda_.5} parent=0 // pred_fallthru
    _
  // Predicated region
  $region38: #{_lambda_.5} parent=0 // pred_check
    _
  $region39: #{_lambda_.5} parent=0 // pred_check_branch
    %34 = sbr.rel (0) target = $region41
  $region40: #{_lambda_.5} parent=0 // pred_region
    _
  $region41: #{_lambda_.5} parent=0 // pred_fallthru
    _
  %v36 = vld [vmem:[%s0] sm:$0xff]
  %v37 = vld [vmem:[%s0 + $0x8] sm:$0xff]
  %v38 = vld [vmem:[%s1] sm:$0xf]
  %v39 = vld [vmem:[%s1 + $0x4] sm:$0xf]
  %s40 = scalar_lea.vmem %s1, 8
  %v41 = vld [vmem:[%s40] sm:$0xf]
  %v42 = vld [vmem:[%s40 + $0x4] sm:$0xf]
  %s43 = scalar_lea.vmem %s1, 16
  %v44 = vld [vmem:[%s43] sm:$0xf]
  %v45 = vld [vmem:[%s43 + $0x4] sm:$0xf]
  %s46 = scalar_lea.vmem %s1, 24
  %v47 = vld [vmem:[%s46] sm:$0xf]
  %v48 = vld [vmem:[%s46 + $0x4] sm:$0xf]
  %v51 = vunpack.c.l.b16 %v38
  %v52 = vunpack.c.l.b16 %v39
  %v53 = vpack.c.b16 %v52, %v51
  %v56 = vunpack.c.l.b16 %v41
  %v57 = vunpack.c.l.b16 %v42
  %v58 = vpack.c.b16 %v57, %v56
  %59 = vrot.lane.b32.xlu0 %v58, 8
  %v60 = vpop.permute.xlu0 %59
  %v63 = vunpack.c.l.b16 %v44
  %v64 = vunpack.c.l.b16 %v45
  %v65 = vpack.c.b16 %v64, %v63
  %66 = vrot.lane.b32.xlu0 %v65, 16
  %v67 = vpop.permute.xlu0 %66
  %v70 = vunpack.c.l.b16 %v47
  %v71 = vunpack.c.l.b16 %v48
  %v72 = vpack.c.b16 %v71, %v70
  %73 = vrot.lane.b32.xlu0 %v72, 24
  %v74 = vpop.permute.xlu0 %73
  %vm75 = vcmask 64512
  %v78 = vsel %vm75, %v53, %v60
  %vm79 = vcmask 130048
  %v81 = vsel %vm79, %v78, %v67
  %vm82 = vcmask 195584
  %v84 = vsel %vm82, %v81, %v74
  %v86 = vunpack.c.l.bf16 %v84
  %v87 = vunpack.c.h.bf16 %v84
  %v88 = vadd.f32 %v36, %v86
  %v89 = vadd.f32 %v37, %v87
  %v90 = vld [vmem:[%s6] sm:$0x1]
  %v91 = vld [vmem:[%s7] sm:$0x1]
  %vm92 = vcmask 261120
  %v93 = vsel %vm92, %v88, 0.0
  %94 = vadd.xlane.f32.xlu0 %v93
  %v95 = vpop.xlane.xlu0 %94
  %v96 = vsel %vm92, %v89, 0.0
  %97 = vadd.xlane.f32.xlu0 %v96
  %v98 = vpop.xlane.xlu0 %97
  %v99 = vrcp.pop 32.0
  %v100 = vmul.f32 32.0, %v99
  %v101 = vsub.f32 1.0, %v100
  %v102 = vmul.f32 %v99, %v101
  %v103 = vadd.f32 %v99, %v102
  %vm104 = vweird.f32 %v99
  %v105 = vsel %vm104, %v99, %v103
  %v106 = vmul.f32 %v95, %v105
  %v107 = vmul.f32 %v98, %v105
  %v108 = vsub.f32 %v88, %v106
  %v109 = vsub.f32 %v89, %v107
  %v110 = vmul.f32 %v108, %v108
  %v111 = vmul.f32 %v109, %v109
  %v112 = vsel %vm92, %v110, 0.0
  %113 = vadd.xlane.f32.xlu0 %v112
  %v114 = vpop.xlane.xlu0 %113
  %v115 = vsel %vm92, %v111, 0.0
  %116 = vadd.xlane.f32.xlu0 %v115
  %v117 = vpop.xlane.xlu0 %116
  %v118 = vmul.f32 %v114, %v105
  %v119 = vmul.f32 %v117, %v105
  %v120 = vadd.f32 %v118, 1e-05
  %v121 = vadd.f32 %v119, 1e-05
  %v122 = vrsqrt.pop %v120
  %v123 = vmul.f32 %v122, %v120
  %v124 = vmul.f32 %v123, %v122
  %v125 = vmul.f32 0.5, %v124
  %v126 = vsub.f32 1.5, %v125
  %v127 = vmul.f32 %v122, %v126
  %vm128 = vweird.f32 %v120
  %vm129 = vweird.f32 %v122
  %vm130 = vmor %vm128, %vm129
  %v131 = vsel %vm130, %v122, %v127
  %v132 = vrsqrt.pop %v121
  %v133 = vmul.f32 %v132, %v121
  %v134 = vmul.f32 %v133, %v132
  %v135 = vmul.f32 0.5, %v134
  %v136 = vsub.f32 1.5, %v135
  %v137 = vmul.f32 %v132, %v136
  %vm138 = vweird.f32 %v121
  %vm139 = vweird.f32 %v132
  %vm140 = vmor %vm138, %vm139
  %v141 = vsel %vm140, %v132, %v137
  %v142 = vmul.f32 %v108, %v131
  %v143 = vmul.f32 %v109, %v141
  %v145 = vperm.slane %v90, 0
  %v147 = vmul.f32 %v142, %v145
  %v148 = vmul.f32 %v143, %v145
  %v150 = vperm.slane %v91, 0
  %v152 = vadd.f32 %v147, %v150
  %v153 = vadd.f32 %v148, %v150
  %v154 = vpack.c.bf16 %v153, %v152
  %v155 = vld [vmem:[%s2] sm:$0xf]
  %v156 = vld [vmem:[%s2 + $0x4] sm:$0xf]
  %v157 = vld [vmem:[%s2 + $0x8] sm:$0xf]
  %v158 = vld [vmem:[%s2 + $0xc] sm:$0xf]
  %v159 = vld [vmem:[%s3] sm:$0x1]
  %v161 = vperm.slane %v159, 0
  %v167 = vunpack.c.l.b16 %v155
  %v168 = vunpack.c.l.b16 %v156
  %v169 = vunpack.c.l.b16 %v157
  %v170 = vunpack.c.l.b16 %v158
  %v171 = vpack.c.b16 %v168, %v167
  %v172 = vpack.c.b16 %v170, %v169
  %v176 = vsel %vm92, %v154, 0
  %178 = vmatpush.bf16.msra.mxu0 0
  %179 = vmatpush.bf16.msra.mxu0 0
  %180 = vmatpush.bf16.msra.mxu0 0
  %181 = vmatpush.bf16.msra.mxu0 0
  %182 = vmatpush.bf16.msra.mxu0 0
  %183 = vmatpush.bf16.msra.mxu0 0
  %184 = vmatpush.bf16.msra.mxu0 %v172
  %185 = vmatpush.bf16.msra.mxu0 %v171
  %186 = vmatmul.bf16.gmra.mxu0 %v176
  %v187 = vpop.f32.mrf.mxu0
  %v188 = vadd.f32 %v161, %v187
  %v189 = vpop.f32.mrf.mxu0
  %v190 = vadd.f32 %v161, %v189
  %191 = vdwg.mxu0
  %v192 = vmul.f32 %v188, 0.5
  %v193 = vmul.f32 %v190, 0.5
  %v194 = vmul.f32 %v188, 0.70710677
  %v195 = vmul.f32 %v190, 0.70710677
  %v196 = vand.u32 2147483647, %v194
  %v197 = vand.u32 2147483647, %v195
  %v198 = vmul.f32 %v196, 0.3275911
  %v199 = vmul.f32 %v197, 0.3275911
  %v200 = vadd.f32 %v198, 1.0
  %v201 = vadd.f32 %v199, 1.0
  %v202 = vrcp.pop %v200
  %v203 = vmul.f32 %v200, %v202
  %v204 = vsub.f32 1.0, %v203
  %v205 = vmul.f32 %v202, %v204
  %v206 = vadd.f32 %v202, %v205
  %vm207 = vweird.f32 %v200
  %vm208 = vweird.f32 %v202
  %vm209 = vmor %vm207, %vm208
  %v210 = vsel %vm209, %v202, %v206
  %v211 = vand.u32 2147483647, %v200
  %vm212 = vcmp.eq.f32.partialorder %v211, 8.507059e+37
  %v213 = vand.u32 %v200, 2147483648
  %v214 = vor.u32 1.1754944e-38, %v213
  %v215 = vsel %vm212, %v214, %v210
  %v216 = vmul.f32 1.0, %v215
  %v217 = vrcp.pop %v201
  %v218 = vmul.f32 %v201, %v217
  %v219 = vsub.f32 1.0, %v218
  %v220 = vmul.f32 %v217, %v219
  %v221 = vadd.f32 %v217, %v220
  %vm222 = vweird.f32 %v201
  %vm223 = vweird.f32 %v217
  %vm224 = vmor %vm222, %vm223
  %v225 = vsel %vm224, %v217, %v221
  %v226 = vand.u32 2147483647, %v201
  %vm227 = vcmp.eq.f32.partialorder %v226, 8.507059e+37
  %v228 = vand.u32 %v201, 2147483648
  %v229 = vor.u32 1.1754944e-38, %v228
  %v230 = vsel %vm227, %v229, %v225
  %v231 = vmul.f32 1.0, %v230
  %v232 = vmul.f32 %v216, 1.0614054
  %v233 = vmul.f32 %v231, 1.0614054
  %v234 = vadd.f32 %v232, -1.4531521
  %v235 = vadd.f32 %v233, -1.4531521
  %v236 = vmul.f32 %v234, %v216
  %v237 = vmul.f32 %v235, %v231
  %v238 = vadd.f32 %v236, 1.4214138
  %v239 = vadd.f32 %v237, 1.4214138
  %v240 = vmul.f32 %v238, %v216
  %v241 = vmul.f32 %v239, %v231
  %v242 = vadd.f32 %v240, -0.28449672
  %v243 = vadd.f32 %v241, -0.28449672
  %v244 = vmul.f32 %v242, %v216
  %v245 = vmul.f32 %v243, %v231
  %v246 = vadd.f32 %v244, 0.2548296
  %v247 = vadd.f32 %v245, 0.2548296
  %v248 = vmul.f32 %v246, %v216
  %v249 = vmul.f32 %v247, %v231
  %v250 = vsub.f32 0.0, %v196
  %v251 = vsub.f32 0.0, %v197
  %v252 = vmul.f32 %v250, %v196
  %v253 = vmul.f32 %v251, %v197
  %v254 = vmul.f32 %v252, 1.442695
  %v255 = vpow.pop %v254
  %v256 = vmul.f32 %v253, 1.442695
  %v257 = vpow.pop %v256
  %v258 = vmul.f32 %v248, %v255
  %v259 = vmul.f32 %v249, %v257
  %v260 = vsub.f32 1.0, %v258
  %v261 = vsub.f32 1.0, %v259
  %vm262 = vcmp.ge.f32.partialorder %v194, 0.0
  %vm263 = vcmp.ge.f32.partialorder %v195, 0.0
  %v264 = vsub.f32 0.0, %v260
  %v265 = vsub.f32 0.0, %v261
  %v266 = vsel %vm262, %v260, %v264
  %v267 = vsel %vm263, %v261, %v265
  %v268 = vadd.f32 %v266, 1.0
  %v269 = vadd.f32 %v267, 1.0
  %v270 = vmul.f32 %v192, %v268
  %v271 = vmul.f32 %v193, %v269
  %v272 = vpack.c.bf16 %v271, %v270
  %v273 = vld [vmem:[%s4] sm:$0xf]
  %v274 = vld [vmem:[%s4 + $0x4] sm:$0xf]
  %v275 = vld [vmem:[%s4 + $0x8] sm:$0xf]
  %v276 = vld [vmem:[%s4 + $0xc] sm:$0xf]
  %v277 = vld [vmem:[%s4 + $0x10] sm:$0xf]
  %v278 = vld [vmem:[%s4 + $0x14] sm:$0xf]
  %v279 = vld [vmem:[%s4 + $0x18] sm:$0xf]
  %v280 = vld [vmem:[%s4 + $0x1c] sm:$0xf]
  %v281 = vld [vmem:[%s4 + $0x20] sm:$0xf]
  %v282 = vld [vmem:[%s4 + $0x24] sm:$0xf]
  %v283 = vld [vmem:[%s4 + $0x28] sm:$0xf]
  %v284 = vld [vmem:[%s4 + $0x2c] sm:$0xf]
  %v285 = vld [vmem:[%s4 + $0x30] sm:$0xf]
  %v286 = vld [vmem:[%s4 + $0x34] sm:$0xf]
  %v287 = vld [vmem:[%s4 + $0x38] sm:$0xf]
  %v288 = vld [vmem:[%s4 + $0x3c] sm:$0xf]
  %v289 = vld [vmem:[%s5] sm:$0x1]
  %v291 = vperm.slane %v289, 0
  %v309 = vunpack.c.l.b16 %v273
  %v310 = vunpack.c.l.b16 %v274
  %v311 = vunpack.c.l.b16 %v275
  %v312 = vunpack.c.l.b16 %v276
  %v313 = vunpack.c.l.b16 %v277
  %v314 = vunpack.c.l.b16 %v278
  %v315 = vunpack.c.l.b16 %v279
  %v316 = vunpack.c.l.b16 %v280
  %v317 = vunpack.c.l.b16 %v281
  %v318 = vunpack.c.l.b16 %v282
  %v319 = vunpack.c.l.b16 %v283
  %v320 = vunpack.c.l.b16 %v284
  %v321 = vunpack.c.l.b16 %v285
  %v322 = vunpack.c.l.b16 %v286
  %v323 = vunpack.c.l.b16 %v287
  %v324 = vunpack.c.l.b16 %v288
  %v325 = vpack.c.b16 %v310, %v309
  %v326 = vpack.c.b16 %v312, %v311
  %v327 = vpack.c.b16 %v314, %v313
  %v328 = vpack.c.b16 %v316, %v315
  %v329 = vpack.c.b16 %v318, %v317
  %v330 = vpack.c.b16 %v320, %v319
  %v331 = vpack.c.b16 %v322, %v321
  %v332 = vpack.c.b16 %v324, %v323
  %341 = vmatpush.bf16.msra.mxu0 %v332
  %342 = vmatpush.bf16.msra.mxu0 %v331
  %343 = vmatpush.bf16.msra.mxu0 %v330
  %344 = vmatpush.bf16.msra.mxu0 %v329
  %345 = vmatpush.bf16.msra.mxu0 %v328
  %346 = vmatpush.bf16.msra.mxu0 %v327
  %347 = vmatpush.bf16.msra.mxu0 %v326
  %348 = vmatpush.bf16.msra.mxu0 %v325
  %349 = vmatmul.bf16.gmra.mxu0 %v272
  %v350 = vpop.f32.mrf.mxu0
  %v351 = vadd.f32 %v291, %v350
  %v352 = vpop.f32.mrf.mxu0
  %v353 = vadd.f32 %v291, %v352
  %354 = vdwg.mxu0
  %v355 = vadd.f32 %v152, %v351
  %v356 = vadd.f32 %v153, %v353
  %v357 = vld [vmem:[%s8] sm:$0x1]
  %v358 = vld [vmem:[%s9] sm:$0x1]
  %v359 = vsel %vm92, %v355, 0.0
  %360 = vadd.xlane.f32.xlu0 %v359
  %v361 = vpop.xlane.xlu0 %360
  %v362 = vsel %vm92, %v356, 0.0
  %363 = vadd.xlane.f32.xlu0 %v362
  %v364 = vpop.xlane.xlu0 %363
  %v365 = vmul.f32 %v361, %v105
  %v366 = vmul.f32 %v364, %v105
  %v367 = vsub.f32 %v355, %v365
  %v368 = vsub.f32 %v356, %v366
  %v369 = vmul.f32 %v367, %v367
  %v370 = vmul.f32 %v368, %v368
  %v371 = vsel %vm92, %v369, 0.0
  %372 = vadd.xlane.f32.xlu0 %v371
  %v373 = vpop.xlane.xlu0 %372
  %v374 = vsel %vm92, %v370, 0.0
  %375 = vadd.xlane.f32.xlu0 %v374
  %v376 = vpop.xlane.xlu0 %375
  %v377 = vmul.f32 %v373, %v105
  %v378 = vmul.f32 %v376, %v105
  %v379 = vadd.f32 %v377, 1e-05
  %v380 = vadd.f32 %v378, 1e-05
  %v381 = vrsqrt.pop %v379
  %v382 = vmul.f32 %v381, %v379
  %v383 = vmul.f32 %v382, %v381
  %v384 = vmul.f32 0.5, %v383
  %v385 = vsub.f32 1.5, %v384
  %v386 = vmul.f32 %v381, %v385
  %vm387 = vweird.f32 %v379
  %vm388 = vweird.f32 %v381
  %vm389 = vmor %vm387, %vm388
  %v390 = vsel %vm389, %v381, %v386
  %v391 = vrsqrt.pop %v380
  %v392 = vmul.f32 %v391, %v380
  %v393 = vmul.f32 %v392, %v391
  %v394 = vmul.f32 0.5, %v393
  %v395 = vsub.f32 1.5, %v394
  %v396 = vmul.f32 %v391, %v395
  %vm397 = vweird.f32 %v380
  %vm398 = vweird.f32 %v391
  %vm399 = vmor %vm397, %vm398
  %v400 = vsel %vm399, %v391, %v396
  %v401 = vmul.f32 %v367, %v390
  %v402 = vmul.f32 %v368, %v400
  %v404 = vperm.slane %v357, 0
  %v406 = vmul.f32 %v401, %v404
  %v407 = vmul.f32 %v402, %v404
  %v409 = vperm.slane %v358, 0
  %v411 = vadd.f32 %v406, %v409
  %v412 = vadd.f32 %v407, %v409
  %413 = vst.msk [vmem:[%s10] sm:$0xff] %vm92, %v411
  %414 = vst.msk [vmem:[%s10 + $0x8] sm:$0xff] %vm92, %v412
  // Predicated region
  $region42: #{_lambda_.5} parent=0 // pred_check
    _
  $region43: #{_lambda_.5} parent=0 // pred_check_branch
    %416 = sbr.rel (0) target = $region45
  $region44: #{_lambda_.5} parent=0 // pred_region
    _
  $region45: #{_lambda_.5} parent=0 // pred_fallthru
    _
  // Predicated region
  $region46: #{_lambda_.5} parent=0 // pred_check
    _
  $region47: #{_lambda_.5} parent=0 // pred_check_branch
    %418 = sbr.rel (0) target = $region49
  $region48: #{_lambda_.5} parent=0 // pred_region
    _
  $region49: #{_lambda_.5} parent=0 // pred_fallthru
    _

</llo_original>
